<compile_context>
chip_gen: v7x
topology: tpu7x:2x2x1
jax: 0.10.0
libtpu: 0.0.40
codegen_flags: <defaults>
</compile_context>

<pallas_src>
import functools

import jax
import jax.numpy as jnp
from jax.experimental import pallas as pl
from jax.experimental.pallas import tpu as pltpu


def mla_kernel(x_ref, cos_ref, sin_ref, bias_ref,
               waq_ref, wakv_ref, gaq_ref, gakv_ref,
               wq_ref, wqr_ref, wk_ref, wkr_ref, wv_ref,
               woa_ref, wob_ref,
               out_ref,
               qlat_scr, k_scr, v_scr, *,
               num_heads, head_dim, rms_eps, q_tile):
    H, Dh, TQ = num_heads, head_dim, q_tile
    Lq = waq_ref.shape[-1]
    Lkv = wakv_ref.shape[-1]
    bf16 = jnp.bfloat16
    mm = functools.partial(jnp.dot, preferred_element_type=jnp.float32)

    tq = pl.program_id(1)

    # ---------- once per batch element: shared latents + RoPE'd K and V ----------
    @pl.when(tq == 0)
    def _():
        x_all = x_ref[...]                                       # [T, D] bf16
        lat_q = mm(x_all, waq_ref[...])                          # [T, Lq]  f32
        lat_kv = mm(x_all, wakv_ref[...])                        # [T, Lkv] f32
        # RMSNorm over the concatenated latent: variance from the two sum-of-squares
        # halves (avoids a lane slice at the non-128 offset Lq).
        ssq = (jnp.sum(lat_q * lat_q, axis=-1, keepdims=True)
               + jnp.sum(lat_kv * lat_kv, axis=-1, keepdims=True))
        inv = jax.lax.rsqrt(ssq * (1.0 / float(Lq + Lkv)) + rms_eps)
        qlat_scr[...] = (lat_q * inv * gaq_ref[...]).astype(bf16)
        kv_lat = (lat_kv * inv * gakv_ref[...]).astype(bf16)     # [T, Lkv]

        cos_k = cos_ref[...]                                     # [T, H*Dh] bf16
        sin_k = sin_ref[...]
        # Head-stacked, lane-dense K/V projections; rotate_half folded into wkr, cos/sin
        # padded to head_dim (ones / zeros on pass dims) so RoPE is two full-width FMAs.
        k_all = (mm(kv_lat, wk_ref[...]) * cos_k
                 + mm(kv_lat, wkr_ref[...]) * sin_k).astype(bf16)   # [T, H*Dh]
        v_all = mm(kv_lat, wv_ref[...]).astype(bf16)                # [T, H*Dh]
        for h in range(H):                                       # scatter to head-major cache
            k_scr[h] = k_all[:, h * Dh:(h + 1) * Dh]
            v_scr[h] = v_all[:, h * Dh:(h + 1) * Dh]

    # ---------- per query tile ----------
    row0 = pl.multiple_of(tq * TQ, TQ)
    q_lat = qlat_scr[pl.ds(row0, TQ), :]                         # [TQ, Lq] bf16
    cos_q = cos_ref[pl.ds(row0, TQ), :]
    sin_q = sin_ref[pl.ds(row0, TQ), :]
    # Head-stacked, lane-dense Q projection + RoPE.
    q_all = (mm(q_lat, wq_ref[...]) * cos_q
             + mm(q_lat, wqr_ref[...]) * sin_q).astype(bf16)     # [TQ, H*Dh]

    bias = bias_ref[...]                                         # [1, T] additive key bias
    scale = 1.0 / (float(Dh) ** 0.5)                             # SDPA default scale
    qk_dims = (((1,), (1,)), ((), ()))                           # q @ k.T

    head_outs = []
    for h in range(H):                                           # static unroll (see TODO)
        q_h = q_all[:, h * Dh:(h + 1) * Dh]                      # [TQ, Dh] bf16
        k_h = k_scr[h]                                           # [T, Dh]  bf16 (cached)
        v_h = v_scr[h]                                           # [T, Dh]  bf16 (cached)
        s = jax.lax.dot_general(q_h, k_h, qk_dims,
                                preferred_element_type=jnp.float32)   # [TQ, T] f32
        s = s * scale + bias
        s = s - jnp.max(s, axis=-1, keepdims=True)
        e = jnp.exp(s)
        p = e * pl.reciprocal(jnp.sum(e, axis=-1, keepdims=True), approx=True)
        head_outs.append(mm(p.astype(bf16), v_h).astype(bf16))   # [TQ, Dh]

    attn_all = jnp.concatenate(head_outs, axis=-1)               # [TQ, H*Dh] bf16
    o_lat = mm(attn_all, woa_ref[...])                           # [TQ, Lo] f32 (one matmul)
    out = mm(o_lat.astype(bf16), wob_ref[...])                   # [TQ, D]  f32
    out_ref[...] = out.astype(out_ref.dtype)


def mla_forward(x, cos, sin, key_bias, wa, ga, wqb, wkvb, woa, wob, *,
                num_heads, head_dim, rope_dims, q_latent_dim, kv_latent_dim,
                rms_eps, q_tile=256):
    B, T, D = x.shape
    H, Dh, R = num_heads, head_dim, rope_dims
    Lq, Lkv = q_latent_dim, kv_latent_dim
    Lo = woa.shape[0]
    Rh = R // 2
    HD = H * Dh

    TQ = min(q_tile, T)
    assert T % TQ == 0, "sequence length must be divisible by the query tile"
    assert TQ == T or TQ % 8 == 0
    NQ = T // TQ

    wdt = jnp.bfloat16
    f32 = jnp.float32

    # ---------- wrapper-side layout plumbing (pure precompute) ----------
    x_bf = x.astype(wdt)                                                  # bf16 activations

    wa_q = wa[:Lq].T.astype(wdt)                                          # [D, Lq]
    wa_kv = wa[Lq:].T.astype(wdt)                                         # [D, Lkv]
    ga_q = ga[:Lq].reshape(1, Lq).astype(f32)
    ga_kv = ga[Lq:].reshape(1, Lkv).astype(f32)

    def fold_rotate_half(w_t):                                            # [L, H*Dh]
        lat = w_t.shape[0]
        w3 = w_t.reshape(lat, H, Dh)
        rot = jnp.concatenate(
            [-w3[..., Rh:R], w3[..., :Rh], jnp.zeros_like(w3[..., R:])], axis=-1)
        return rot.reshape(lat, HD)

    wq_s = wqb.T.astype(wdt)                                              # [Lq, H*Dh]
    wq_rot = fold_rotate_half(wqb.T).astype(wdt)
    wk_s = wkvb[:HD].T.astype(wdt)                                        # [Lkv, H*Dh]
    wk_rot = fold_rotate_half(wkvb[:HD].T).astype(wdt)
    wv_s = wkvb[HD:].T.astype(wdt)                                        # [Lkv, H*Dh]
    woa_s = woa.T.astype(wdt)                                             # [H*Dh, Lo]
    wob_t = wob.T.astype(wdt)                                             # [Lo, D]

    # cos/sin padded to head_dim (ones / zeros on pass dims), tiled to all heads, bf16.
    cos_full = jnp.concatenate([cos.astype(f32), jnp.ones((T, Dh - R), f32)], axis=-1)
    sin_full = jnp.concatenate([sin.astype(f32), jnp.zeros((T, Dh - R), f32)], axis=-1)
    cos_hd = jnp.tile(cos_full, (1, H)).astype(wdt)                       # [T, H*Dh]
    sin_hd = jnp.tile(sin_full, (1, H)).astype(wdt)

    bias3 = key_bias.reshape(B, 1, T).astype(f32)                         # additive per-key bias

    kernel = functools.partial(mla_kernel, num_heads=H, head_dim=Dh,
                               rms_eps=rms_eps, q_tile=TQ)

    return pl.pallas_call(
        kernel,
        out_shape=jax.ShapeDtypeStruct((B, T, D), x.dtype),
        grid_spec=pltpu.PrefetchScalarGridSpec(
            num_scalar_prefetch=0,
            grid=(B, NQ),
            in_specs=[
                pl.BlockSpec((None, T, D), lambda b, t: (b, 0, 0)),       # x (bf16, per batch)
                pl.BlockSpec((T, HD), lambda b, t: (0, 0)),               # cos (padded+tiled)
                pl.BlockSpec((T, HD), lambda b, t: (0, 0)),               # sin (padded+tiled)
                pl.BlockSpec((None, 1, T), lambda b, t: (b, 0, 0)),       # additive key bias
                pl.BlockSpec((D, Lq), lambda b, t: (0, 0)),               # qkv_a (q half)^T
                pl.BlockSpec((D, Lkv), lambda b, t: (0, 0)),              # qkv_a (kv half)^T
                pl.BlockSpec((1, Lq), lambda b, t: (0, 0)),               # RMSNorm weight (q)
                pl.BlockSpec((1, Lkv), lambda b, t: (0, 0)),              # RMSNorm weight (kv)
                pl.BlockSpec((Lq, HD), lambda b, t: (0, 0)),              # q_b stacked
                pl.BlockSpec((Lq, HD), lambda b, t: (0, 0)),              # q_b rotate-half folded
                pl.BlockSpec((Lkv, HD), lambda b, t: (0, 0)),             # k_b stacked
                pl.BlockSpec((Lkv, HD), lambda b, t: (0, 0)),             # k_b rotate-half folded
                pl.BlockSpec((Lkv, HD), lambda b, t: (0, 0)),             # v_b stacked
                pl.BlockSpec((HD, Lo), lambda b, t: (0, 0)),              # o_a^T (stacked)
                pl.BlockSpec((Lo, D), lambda b, t: (0, 0)),               # o_b^T
            ],
            out_specs=pl.BlockSpec((None, TQ, D), lambda b, t: (b, t, 0)),
            scratch_shapes=[
                pltpu.VMEM((T, Lq), jnp.bfloat16),                        # normalized q-latent
                pltpu.VMEM((H, T, Dh), jnp.bfloat16),                     # RoPE'd K cache
                pltpu.VMEM((H, T, Dh), jnp.bfloat16),                     # V cache
            ],
        ),
        compiler_params=pltpu.CompilerParams(
            dimension_semantics=("parallel", "arbitrary"),
            vmem_limit_bytes=64 * 1024 * 1024),
    )(x_bf, cos_hd, sin_hd, bias3, wa_q, wa_kv, ga_q, ga_kv,
      wq_s, wq_rot, wk_s, wk_rot, wv_s, woa_s, wob_t)


def mla_reference(x, cos, sin, key_bias, wa, ga, wqb, wkvb, woa, wob, *,
                  num_heads, head_dim, rope_dims, q_latent_dim, kv_latent_dim,
                  rms_eps):
    """Pure-JAX f32 mirror of the PyTorch forward (eval mode)."""
    B, T, D = x.shape
    H, Dh, R = num_heads, head_dim, rope_dims
    lat = jnp.einsum('btd,ld->btl', x, wa)
    var = jnp.mean(lat * lat, axis=-1, keepdims=True)
    lat = lat * jax.lax.rsqrt(var + rms_eps) * ga
    q_lat, kv_lat = lat[..., :q_latent_dim], lat[..., q_latent_dim:]
    q = jnp.einsum('btl,ol->bto', q_lat, wqb)
    kv = jnp.einsum('btl,ol->bto', kv_lat, wkvb)
    k, v = kv[..., :H * Dh], kv[..., H * Dh:]
    q = q.reshape(B, T, H, Dh).transpose(0, 2, 1, 3)
    k = k.reshape(B, T, H, Dh).transpose(0, 2, 1, 3)
    v = v.reshape(B, T, H, Dh).transpose(0, 2, 1, 3)
    cb, sb = cos[None, None], sin[None, None]

    def rope(t):
        tr, tp = t[..., :R], t[..., R:]
        rot = jnp.concatenate([-tr[..., R // 2:], tr[..., :R // 2]], axis=-1)
        return jnp.concatenate([tr * cb + rot * sb, tp], axis=-1)

    q, k = rope(q), rope(k)
    scale = 1.0 / jnp.sqrt(jnp.float32(Dh))
    scores = jnp.einsum('bhtd,bhsd->bhts', q, k) * scale + key_bias[:, None, None, :]
    p = jax.nn.softmax(scores, axis=-1)
    attn = jnp.einsum('bhts,bhsd->bhtd', p, v)
    attn = attn.transpose(0, 2, 1, 3).reshape(B, T, H * Dh)
    o_lat = jnp.einsum('bto,lo->btl', attn, woa)
    return jnp.einsum('btl,dl->btd', o_lat, wob)


if __name__ == "__main__":
    # Small config consistent with the module.
    B, T, D = 2, 16, 128          # batch, seq, hidden_size
    H, Dh, R = 4, 32, 16          # num_attention_heads, head_dim, rope_dims
    Lq, Lkv, Lo = 64, 64, 64      # q_latent_dim, kv_latent_dim, o_latent_dim
    rms_eps = 1e-6
    rope_theta = 10000.0

    key = jax.random.PRNGKey(0)
    ks = jax.random.split(key, 8)
    x = jax.random.normal(ks[0], (B, T, D), jnp.float32)

    # PyTorch Linear layout: [out_features, in_features].
    wa = jax.random.normal(ks[1], (Lq + Lkv, D), jnp.float32) * 0.05        # qkv_a_proj
    ga = jnp.ones((Lq + Lkv,), jnp.float32)                                 # RMSNorm weight
    wqb = jax.random.normal(ks[2], (H * Dh, Lq), jnp.float32) * 0.05        # q_b_proj
    wkvb = jax.random.normal(ks[3], (2 * H * Dh, Lkv), jnp.float32) * 0.05  # kv_b_proj
    woa = jax.random.normal(ks[4], (Lo, H * Dh), jnp.float32) * 0.05        # o_a_proj
    wob = jax.random.normal(ks[5], (D, Lo), jnp.float32) * 0.05             # o_b_proj

    # RoPE position embeddings over rope_dims.
    inv_freq = 1.0 / (rope_theta ** (jnp.arange(0, R, 2, dtype=jnp.float32) / R))
    pos = jnp.arange(T, dtype=jnp.float32)
    freqs = jnp.einsum('t,f->tf', pos, inv_freq)
    emb = jnp.concatenate([freqs, freqs], axis=-1)
    cos, sin = jnp.cos(emb), jnp.sin(emb)

    # Additive per-key padding bias: mask out the last 4 key positions of batch 1.
    key_bias = jnp.zeros((B, T), jnp.float32).at[1, -4:].set(-1e9)

    kwargs = dict(num_heads=H, head_dim=Dh, rope_dims=R,
                  q_latent_dim=Lq, kv_latent_dim=Lkv, rms_eps=rms_eps)

    out = jax.block_until_ready(
        mla_forward(x, cos, sin, key_bias, wa, ga, wqb, wkvb, woa, wob, **kwargs))
    ref = mla_reference(x, cos, sin, key_bias, wa, ga, wqb, wkvb, woa, wob, **kwargs)

    assert out.shape == (B, T, D)
    err = float(jnp.max(jnp.abs(out - ref)))
    tol = 5e-2 * float(jnp.max(jnp.abs(ref))) + 1e-5   # bf16-MXU vs f32 reference
    assert err <= tol, f"max abs err {err} > tol {tol}"
    print("KERNEL_OK")
</pallas_src>

<mosaic_0001>
module attributes {stable_mosaic.version = 11 : i64} {
  func.func @mla_kernel(%arg0: i32, %arg1: i32, %arg2: memref<1x16x128xbf16, #tpu.memory_space<vmem>>, %arg3: memref<16x128xbf16, #tpu.memory_space<vmem>>, %arg4: memref<16x128xbf16, #tpu.memory_space<vmem>>, %arg5: memref<1x1x16xf32, #tpu.memory_space<vmem>>, %arg6: memref<128x64xbf16, #tpu.memory_space<vmem>>, %arg7: memref<128x64xbf16, #tpu.memory_space<vmem>>, %arg8: memref<1x64xf32, #tpu.memory_space<vmem>>, %arg9: memref<1x64xf32, #tpu.memory_space<vmem>>, %arg10: memref<64x128xbf16, #tpu.memory_space<vmem>>, %arg11: memref<64x128xbf16, #tpu.memory_space<vmem>>, %arg12: memref<64x128xbf16, #tpu.memory_space<vmem>>, %arg13: memref<64x128xbf16, #tpu.memory_space<vmem>>, %arg14: memref<64x128xbf16, #tpu.memory_space<vmem>>, %arg15: memref<128x64xbf16, #tpu.memory_space<vmem>>, %arg16: memref<64x128xbf16, #tpu.memory_space<vmem>>, %arg17: memref<1x16x128xf32, #tpu.memory_space<vmem>>, %arg18: memref<16x64xbf16, #tpu.memory_space<vmem>>, %arg19: memref<4x16x32xbf16, #tpu.memory_space<vmem>>, %arg20: memref<4x16x32xbf16, #tpu.memory_space<vmem>>) attributes {dimension_semantics = [#tpu.dimension_semantics<parallel>, #tpu.dimension_semantics<arbitrary>], iteration_bounds = array<i64: 2, 1>, scalar_prefetch = 0 : i64, scratch_operands = 3 : i64, tpu.core_type = #tpu.core_type<tc>, window_params = [{transform_indices = @transform_0, window_bounds = array<i64: 1, 16, 128>}, {pipeline_mode = #tpu.pipeline_mode<synchronous>, transform_indices = @transform_1, window_bounds = array<i64: 16, 128>}, {pipeline_mode = #tpu.pipeline_mode<synchronous>, transform_indices = @transform_2, window_bounds = array<i64: 16, 128>}, {transform_indices = @transform_3, window_bounds = array<i64: 1, 1, 16>}, {pipeline_mode = #tpu.pipeline_mode<synchronous>, transform_indices = @transform_4, window_bounds = array<i64: 128, 64>}, {pipeline_mode = #tpu.pipeline_mode<synchronous>, transform_indices = @transform_5, window_bounds = array<i64: 128, 64>}, {pipeline_mode = #tpu.pipeline_mode<synchronous>, transform_indices = @transform_6, window_bounds = array<i64: 1, 64>}, {pipeline_mode = #tpu.pipeline_mode<synchronous>, transform_indices = @transform_7, window_bounds = array<i64: 1, 64>}, {pipeline_mode = #tpu.pipeline_mode<synchronous>, transform_indices = @transform_8, window_bounds = array<i64: 64, 128>}, {pipeline_mode = #tpu.pipeline_mode<synchronous>, transform_indices = @transform_9, window_bounds = array<i64: 64, 128>}, {pipeline_mode = #tpu.pipeline_mode<synchronous>, transform_indices = @transform_10, window_bounds = array<i64: 64, 128>}, {pipeline_mode = #tpu.pipeline_mode<synchronous>, transform_indices = @transform_11, window_bounds = array<i64: 64, 128>}, {pipeline_mode = #tpu.pipeline_mode<synchronous>, transform_indices = @transform_12, window_bounds = array<i64: 64, 128>}, {pipeline_mode = #tpu.pipeline_mode<synchronous>, transform_indices = @transform_13, window_bounds = array<i64: 128, 64>}, {pipeline_mode = #tpu.pipeline_mode<synchronous>, transform_indices = @transform_14, window_bounds = array<i64: 64, 128>}, {transform_indices = @transform_15, window_bounds = array<i64: 1, 16, 128>}]} {
    %c0_i32 = arith.constant 0 : i32
    %0 = arith.cmpi eq, %arg1, %c0_i32 : i32
    %1 = arith.extui %0 : i1 to i32
    %c0_i32_0 = arith.constant 0 : i32
    %2 = arith.cmpi ne, %1, %c0_i32_0 : i32
    scf.if %2 {
      %c0_61 = arith.constant 0 : index
      %c0_62 = arith.constant 0 : index
      %c0_63 = arith.constant 0 : index
      %124 = vector.load %arg2[%c0_61, %c0_62, %c0_63] : memref<1x16x128xbf16, #tpu.memory_space<vmem>>, vector<1x16x128xbf16>
      %125 = vector.shape_cast %124 : vector<1x16x128xbf16> to vector<16x128xbf16>
      %c0_64 = arith.constant 0 : index
      %c0_65 = arith.constant 0 : index
      %126 = vector.load %arg6[%c0_64, %c0_65] : memref<128x64xbf16, #tpu.memory_space<vmem>>, vector<128x64xbf16>
      %cst_66 = arith.constant dense<0.000000e+00> : vector<16x64xf32>
      %127 = tpu.matmul %125, %126, %cst_66 {dimension_numbers = #tpu.dot_dimension_numbers<[1], [0], [0], [1], [0, 0, 1, 1], [], []>} : vector<16x128xbf16>, vector<128x64xbf16>, vector<16x64xf32> -> vector<16x64xf32>
      %c0_67 = arith.constant 0 : index
      %c0_68 = arith.constant 0 : index
      %128 = vector.load %arg7[%c0_67, %c0_68] : memref<128x64xbf16, #tpu.memory_space<vmem>>, vector<128x64xbf16>
      %cst_69 = arith.constant dense<0.000000e+00> : vector<16x64xf32>
      %129 = tpu.matmul %125, %128, %cst_69 {dimension_numbers = #tpu.dot_dimension_numbers<[1], [0], [0], [1], [0, 0, 1, 1], [], []>} : vector<16x128xbf16>, vector<128x64xbf16>, vector<16x64xf32> -> vector<16x64xf32>
      %130 = arith.mulf %127, %127 : vector<16x64xf32>
      %cst_70 = arith.constant dense<0.000000e+00> : vector<16xf32>
      %131 = vector.multi_reduction <add>, %130, %cst_70 [1] : vector<16x64xf32> to vector<16xf32>
      %132 = vector.shape_cast %131 : vector<16xf32> to vector<16x1xf32>
      %133 = arith.mulf %129, %129 : vector<16x64xf32>
      %cst_71 = arith.constant dense<0.000000e+00> : vector<16xf32>
      %134 = vector.multi_reduction <add>, %133, %cst_71 [1] : vector<16x64xf32> to vector<16xf32>
      %135 = vector.shape_cast %134 : vector<16xf32> to vector<16x1xf32>
      %136 = arith.addf %132, %135 : vector<16x1xf32>
      %cst_72 = arith.constant 7.812500e-03 : f32
      %137 = vector.broadcast %cst_72 : f32 to vector<16x1xf32>
      %138 = arith.mulf %136, %137 : vector<16x1xf32>
      %cst_73 = arith.constant 9.99999997E-7 : f32
      %139 = vector.broadcast %cst_73 : f32 to vector<16x1xf32>
      %140 = arith.addf %138, %139 : vector<16x1xf32>
      %141 = math.rsqrt %140 : vector<16x1xf32>
      %142 = vector.broadcast %141 : vector<16x1xf32> to vector<16x64xf32>
      %143 = arith.mulf %127, %142 : vector<16x64xf32>
      %c0_74 = arith.constant 0 : index
      %c0_75 = arith.constant 0 : index
      %144 = vector.load %arg8[%c0_74, %c0_75] : memref<1x64xf32, #tpu.memory_space<vmem>>, vector<1x64xf32>
      %145 = vector.broadcast %144 : vector<1x64xf32> to vector<16x64xf32>
      %146 = arith.mulf %143, %145 : vector<16x64xf32>
      %147 = arith.truncf %146 : vector<16x64xf32> to vector<16x64xbf16>
      %c0_76 = arith.constant 0 : index
      %c0_77 = arith.constant 0 : index
      %148 = vector.load %arg18[%c0_76, %c0_77] : memref<16x64xbf16, #tpu.memory_space<vmem>>, vector<16x64xbf16>
      tpu.vector_store %arg18[%c0_76, %c0_77], %147 {strides = array<i32>} : memref<16x64xbf16, #tpu.memory_space<vmem>>, vector<16x64xbf16>,
      %149 = vector.broadcast %141 : vector<16x1xf32> to vector<16x64xf32>
      %150 = arith.mulf %129, %149 : vector<16x64xf32>
      %c0_78 = arith.constant 0 : index
      %c0_79 = arith.constant 0 : index
      %151 = vector.load %arg9[%c0_78, %c0_79] : memref<1x64xf32, #tpu.memory_space<vmem>>, vector<1x64xf32>
      %152 = vector.broadcast %151 : vector<1x64xf32> to vector<16x64xf32>
      %153 = arith.mulf %150, %152 : vector<16x64xf32>
      %154 = arith.truncf %153 : vector<16x64xf32> to vector<16x64xbf16>
      %c0_80 = arith.constant 0 : index
      %c0_81 = arith.constant 0 : index
      %155 = vector.load %arg3[%c0_80, %c0_81] : memref<16x128xbf16, #tpu.memory_space<vmem>>, vector<16x128xbf16>
      %c0_82 = arith.constant 0 : index
      %c0_83 = arith.constant 0 : index
      %156 = vector.load %arg4[%c0_82, %c0_83] : memref<16x128xbf16, #tpu.memory_space<vmem>>, vector<16x128xbf16>
      %c0_84 = arith.constant 0 : index
      %c0_85 = arith.constant 0 : index
      %157 = vector.load %arg12[%c0_84, %c0_85] : memref<64x128xbf16, #tpu.memory_space<vmem>>, vector<64x128xbf16>
      %cst_86 = arith.constant dense<0.000000e+00> : vector<16x128xf32>
      %158 = tpu.matmul %154, %157, %cst_86 {dimension_numbers = #tpu.dot_dimension_numbers<[1], [0], [0], [1], [0, 0, 1, 1], [], []>} : vector<16x64xbf16>, vector<64x128xbf16>, vector<16x128xf32> -> vector<16x128xf32>
      %159 = arith.extf %155 : vector<16x128xbf16> to vector<16x128xf32>
      %160 = arith.mulf %158, %159 : vector<16x128xf32>
      %c0_87 = arith.constant 0 : index
      %c0_88 = arith.constant 0 : index
      %161 = vector.load %arg13[%c0_87, %c0_88] : memref<64x128xbf16, #tpu.memory_space<vmem>>, vector<64x128xbf16>
      %cst_89 = arith.constant dense<0.000000e+00> : vector<16x128xf32>
      %162 = tpu.matmul %154, %161, %cst_89 {dimension_numbers = #tpu.dot_dimension_numbers<[1], [0], [0], [1], [0, 0, 1, 1], [], []>} : vector<16x64xbf16>, vector<64x128xbf16>, vector<16x128xf32> -> vector<16x128xf32>
      %163 = arith.extf %156 : vector<16x128xbf16> to vector<16x128xf32>
      %164 = arith.mulf %162, %163 : vector<16x128xf32>
      %165 = arith.addf %160, %164 : vector<16x128xf32>
      %166 = arith.truncf %165 : vector<16x128xf32> to vector<16x128xbf16>
      %c0_90 = arith.constant 0 : index
      %c0_91 = arith.constant 0 : index
      %167 = vector.load %arg14[%c0_90, %c0_91] : memref<64x128xbf16, #tpu.memory_space<vmem>>, vector<64x128xbf16>
      %cst_92 = arith.constant dense<0.000000e+00> : vector<16x128xf32>
      %168 = tpu.matmul %154, %167, %cst_92 {dimension_numbers = #tpu.dot_dimension_numbers<[1], [0], [0], [1], [0, 0, 1, 1], [], []>} : vector<16x64xbf16>, vector<64x128xbf16>, vector<16x128xf32> -> vector<16x128xf32>
      %169 = arith.truncf %168 : vector<16x128xf32> to vector<16x128xbf16>
      %170 = vector.extract_strided_slice %166 {offsets = [0, 0], sizes = [16, 32], strides = [1, 1]} : vector<16x128xbf16> to vector<16x32xbf16>
      %c0_93 = arith.constant 0 : index
      %c0_94 = arith.constant 0 : index
      %c0_95 = arith.constant 0 : index
      %171 = vector.load %arg19[%c0_93, %c0_94, %c0_95] : memref<4x16x32xbf16, #tpu.memory_space<vmem>>, vector<1x16x32xbf16>
      %172 = vector.shape_cast %171 : vector<1x16x32xbf16> to vector<16x32xbf16>
      %173 = vector.shape_cast %170 : vector<16x32xbf16> to vector<1x16x32xbf16>
      tpu.vector_store %arg19[%c0_93, %c0_94, %c0_95], %173 {strides = array<i32>} : memref<4x16x32xbf16, #tpu.memory_space<vmem>>, vector<1x16x32xbf16>,
      %174 = vector.extract_strided_slice %169 {offsets = [0, 0], sizes = [16, 32], strides = [1, 1]} : vector<16x128xbf16> to vector<16x32xbf16>
      %c0_96 = arith.constant 0 : index
      %c0_97 = arith.constant 0 : index
      %c0_98 = arith.constant 0 : index
      %175 = vector.load %arg20[%c0_96, %c0_97, %c0_98] : memref<4x16x32xbf16, #tpu.memory_space<vmem>>, vector<1x16x32xbf16>
      %176 = vector.shape_cast %175 : vector<1x16x32xbf16> to vector<16x32xbf16>
      %177 = vector.shape_cast %174 : vector<16x32xbf16> to vector<1x16x32xbf16>
      tpu.vector_store %arg20[%c0_96, %c0_97, %c0_98], %177 {strides = array<i32>} : memref<4x16x32xbf16, #tpu.memory_space<vmem>>, vector<1x16x32xbf16>,
      %178 = vector.extract_strided_slice %166 {offsets = [0, 32], sizes = [16, 32], strides = [1, 1]} : vector<16x128xbf16> to vector<16x32xbf16>
      %c1_99 = arith.constant 1 : index
      %c0_100 = arith.constant 0 : index
      %c0_101 = arith.constant 0 : index
      %179 = vector.load %arg19[%c1_99, %c0_100, %c0_101] : memref<4x16x32xbf16, #tpu.memory_space<vmem>>, vector<1x16x32xbf16>
      %180 = vector.shape_cast %179 : vector<1x16x32xbf16> to vector<16x32xbf16>
      %181 = vector.shape_cast %178 : vector<16x32xbf16> to vector<1x16x32xbf16>
      tpu.vector_store %arg19[%c1_99, %c0_100, %c0_101], %181 {strides = array<i32>} : memref<4x16x32xbf16, #tpu.memory_space<vmem>>, vector<1x16x32xbf16>,
      %182 = vector.extract_strided_slice %169 {offsets = [0, 32], sizes = [16, 32], strides = [1, 1]} : vector<16x128xbf16> to vector<16x32xbf16>
      %c1_102 = arith.constant 1 : index
      %c0_103 = arith.constant 0 : index
      %c0_104 = arith.constant 0 : index
      %183 = vector.load %arg20[%c1_102, %c0_103, %c0_104] : memref<4x16x32xbf16, #tpu.memory_space<vmem>>, vector<1x16x32xbf16>
      %184 = vector.shape_cast %183 : vector<1x16x32xbf16> to vector<16x32xbf16>
      %185 = vector.shape_cast %182 : vector<16x32xbf16> to vector<1x16x32xbf16>
      tpu.vector_store %arg20[%c1_102, %c0_103, %c0_104], %185 {strides = array<i32>} : memref<4x16x32xbf16, #tpu.memory_space<vmem>>, vector<1x16x32xbf16>,
      %186 = vector.extract_strided_slice %166 {offsets = [0, 64], sizes = [16, 32], strides = [1, 1]} : vector<16x128xbf16> to vector<16x32xbf16>
      %c2_105 = arith.constant 2 : index
      %c0_106 = arith.constant 0 : index
      %c0_107 = arith.constant 0 : index
      %187 = vector.load %arg19[%c2_105, %c0_106, %c0_107] : memref<4x16x32xbf16, #tpu.memory_space<vmem>>, vector<1x16x32xbf16>
      %188 = vector.shape_cast %187 : vector<1x16x32xbf16> to vector<16x32xbf16>
      %189 = vector.shape_cast %186 : vector<16x32xbf16> to vector<1x16x32xbf16>
      tpu.vector_store %arg19[%c2_105, %c0_106, %c0_107], %189 {strides = array<i32>} : memref<4x16x32xbf16, #tpu.memory_space<vmem>>, vector<1x16x32xbf16>,
      %190 = vector.extract_strided_slice %169 {offsets = [0, 64], sizes = [16, 32], strides = [1, 1]} : vector<16x128xbf16> to vector<16x32xbf16>
      %c2_108 = arith.constant 2 : index
      %c0_109 = arith.constant 0 : index
      %c0_110 = arith.constant 0 : index
      %191 = vector.load %arg20[%c2_108, %c0_109, %c0_110] : memref<4x16x32xbf16, #tpu.memory_space<vmem>>, vector<1x16x32xbf16>
      %192 = vector.shape_cast %191 : vector<1x16x32xbf16> to vector<16x32xbf16>
      %193 = vector.shape_cast %190 : vector<16x32xbf16> to vector<1x16x32xbf16>
      tpu.vector_store %arg20[%c2_108, %c0_109, %c0_110], %193 {strides = array<i32>} : memref<4x16x32xbf16, #tpu.memory_space<vmem>>, vector<1x16x32xbf16>,
      %194 = vector.extract_strided_slice %166 {offsets = [0, 96], sizes = [16, 32], strides = [1, 1]} : vector<16x128xbf16> to vector<16x32xbf16>
      %c3_111 = arith.constant 3 : index
      %c0_112 = arith.constant 0 : index
      %c0_113 = arith.constant 0 : index
      %195 = vector.load %arg19[%c3_111, %c0_112, %c0_113] : memref<4x16x32xbf16, #tpu.memory_space<vmem>>, vector<1x16x32xbf16>
      %196 = vector.shape_cast %195 : vector<1x16x32xbf16> to vector<16x32xbf16>
      %197 = vector.shape_cast %194 : vector<16x32xbf16> to vector<1x16x32xbf16>
      tpu.vector_store %arg19[%c3_111, %c0_112, %c0_113], %197 {strides = array<i32>} : memref<4x16x32xbf16, #tpu.memory_space<vmem>>, vector<1x16x32xbf16>,
      %198 = vector.extract_strided_slice %169 {offsets = [0, 96], sizes = [16, 32], strides = [1, 1]} : vector<16x128xbf16> to vector<16x32xbf16>
      %c3_114 = arith.constant 3 : index
      %c0_115 = arith.constant 0 : index
      %c0_116 = arith.constant 0 : index
      %199 = vector.load %arg20[%c3_114, %c0_115, %c0_116] : memref<4x16x32xbf16, #tpu.memory_space<vmem>>, vector<1x16x32xbf16>
      %200 = vector.shape_cast %199 : vector<1x16x32xbf16> to vector<16x32xbf16>
      %201 = vector.shape_cast %198 : vector<16x32xbf16> to vector<1x16x32xbf16>
      tpu.vector_store %arg20[%c3_114, %c0_115, %c0_116], %201 {strides = array<i32>} : memref<4x16x32xbf16, #tpu.memory_space<vmem>>, vector<1x16x32xbf16>,
    } else {
    }
    %c16_i32 = arith.constant 16 : i32
    %3 = arith.muli %arg1, %c16_i32 : i32
    %4 = tpu.assume_multiple %3, 16 : i32
    %5 = arith.index_cast %4 : i32 to index
    %c0 = arith.constant 0 : index
    %6 = vector.load %arg18[%5, %c0] : memref<16x64xbf16, #tpu.memory_space<vmem>>, vector<16x64xbf16>
    %7 = arith.index_cast %4 : i32 to index
    %c0_1 = arith.constant 0 : index
    %8 = vector.load %arg3[%7, %c0_1] : memref<16x128xbf16, #tpu.memory_space<vmem>>, vector<16x128xbf16>
    %9 = arith.index_cast %4 : i32 to index
    %c0_2 = arith.constant 0 : index
    %10 = vector.load %arg4[%9, %c0_2] : memref<16x128xbf16, #tpu.memory_space<vmem>>, vector<16x128xbf16>
    %c0_3 = arith.constant 0 : index
    %c0_4 = arith.constant 0 : index
    %11 = vector.load %arg10[%c0_3, %c0_4] : memref<64x128xbf16, #tpu.memory_space<vmem>>, vector<64x128xbf16>
    %cst = arith.constant dense<0.000000e+00> : vector<16x128xf32>
    %12 = tpu.matmul %6, %11, %cst {dimension_numbers = #tpu.dot_dimension_numbers<[1], [0], [0], [1], [0, 0, 1, 1], [], []>} : vector<16x64xbf16>, vector<64x128xbf16>, vector<16x128xf32> -> vector<16x128xf32>
    %13 = arith.extf %8 : vector<16x128xbf16> to vector<16x128xf32>
    %14 = arith.mulf %12, %13 : vector<16x128xf32>
    %c0_5 = arith.constant 0 : index
    %c0_6 = arith.constant 0 : index
    %15 = vector.load %arg11[%c0_5, %c0_6] : memref<64x128xbf16, #tpu.memory_space<vmem>>, vector<64x128xbf16>
    %cst_7 = arith.constant dense<0.000000e+00> : vector<16x128xf32>
    %16 = tpu.matmul %6, %15, %cst_7 {dimension_numbers = #tpu.dot_dimension_numbers<[1], [0], [0], [1], [0, 0, 1, 1], [], []>} : vector<16x64xbf16>, vector<64x128xbf16>, vector<16x128xf32> -> vector<16x128xf32>
    %17 = arith.extf %10 : vector<16x128xbf16> to vector<16x128xf32>
    %18 = arith.mulf %16, %17 : vector<16x128xf32>
    %19 = arith.addf %14, %18 : vector<16x128xf32>
    %20 = arith.truncf %19 : vector<16x128xf32> to vector<16x128xbf16>
    %c0_8 = arith.constant 0 : index
    %c0_9 = arith.constant 0 : index
    %c0_10 = arith.constant 0 : index
    %21 = vector.load %arg5[%c0_8, %c0_9, %c0_10] : memref<1x1x16xf32, #tpu.memory_space<vmem>>, vector<1x1x16xf32>
    %22 = vector.shape_cast %21 : vector<1x1x16xf32> to vector<1x16xf32>
    %23 = vector.extract_strided_slice %20 {offsets = [0, 0], sizes = [16, 32], strides = [1, 1]} : vector<16x128xbf16> to vector<16x32xbf16>
    %c0_11 = arith.constant 0 : index
    %c0_12 = arith.constant 0 : index
    %c0_13 = arith.constant 0 : index
    %24 = vector.load %arg19[%c0_11, %c0_12, %c0_13] : memref<4x16x32xbf16, #tpu.memory_space<vmem>>, vector<1x16x32xbf16>
    %25 = vector.shape_cast %24 : vector<1x16x32xbf16> to vector<16x32xbf16>
    %c0_14 = arith.constant 0 : index
    %c0_15 = arith.constant 0 : index
    %c0_16 = arith.constant 0 : index
    %26 = vector.load %arg20[%c0_14, %c0_15, %c0_16] : memref<4x16x32xbf16, #tpu.memory_space<vmem>>, vector<1x16x32xbf16>
    %27 = vector.shape_cast %26 : vector<1x16x32xbf16> to vector<16x32xbf16>
    %cst_17 = arith.constant dense<0.000000e+00> : vector<16x16xf32>
    %28 = tpu.matmul %23, %25, %cst_17 {dimension_numbers = #tpu.dot_dimension_numbers<[1], [1], [0], [0], [0, 0, 1, 0], [], []>} : vector<16x32xbf16>, vector<16x32xbf16>, vector<16x16xf32> -> vector<16x16xf32>
    %cst_18 = arith.constant 0.176776692 : f32
    %29 = vector.broadcast %cst_18 : f32 to vector<16x16xf32>
    %30 = arith.mulf %28, %29 : vector<16x16xf32>
    %31 = vector.broadcast %22 : vector<1x16xf32> to vector<16x16xf32>
    %32 = arith.addf %30, %31 : vector<16x16xf32>
    %cst_19 = arith.constant dense<0xFF800000> : vector<16xf32>
    %33 = vector.multi_reduction <maximumf>, %32, %cst_19 [1] : vector<16x16xf32> to vector<16xf32>
    %34 = vector.shape_cast %33 : vector<16xf32> to vector<16x1xf32>
    %35 = vector.broadcast %34 : vector<16x1xf32> to vector<16x16xf32>
    %36 = arith.subf %32, %35 : vector<16x16xf32>
    %37 = math.exp %36 : vector<16x16xf32>
    %cst_20 = arith.constant dense<0.000000e+00> : vector<16xf32>
    %38 = vector.multi_reduction <add>, %37, %cst_20 [1] : vector<16x16xf32> to vector<16xf32>
    %39 = vector.shape_cast %38 : vector<16xf32> to vector<16x1xf32>
    %40 = tpu.reciprocal %39 {approx = true} : vector<16x1xf32> -> vector<16x1xf32>
    %41 = vector.broadcast %40 : vector<16x1xf32> to vector<16x16xf32>
    %42 = arith.mulf %37, %41 : vector<16x16xf32>
    %43 = arith.truncf %42 : vector<16x16xf32> to vector<16x16xbf16>
    %cst_21 = arith.constant dense<0.000000e+00> : vector<16x32xf32>
    %44 = tpu.matmul %43, %27, %cst_21 {dimension_numbers = #tpu.dot_dimension_numbers<[1], [0], [0], [1], [0, 0, 1, 1], [], []>} : vector<16x16xbf16>, vector<16x32xbf16>, vector<16x32xf32> -> vector<16x32xf32>
    %45 = arith.truncf %44 : vector<16x32xf32> to vector<16x32xbf16>
    %46 = vector.extract_strided_slice %20 {offsets = [0, 32], sizes = [16, 32], strides = [1, 1]} : vector<16x128xbf16> to vector<16x32xbf16>
    %c1 = arith.constant 1 : index
    %c0_22 = arith.constant 0 : index
    %c0_23 = arith.constant 0 : index
    %47 = vector.load %arg19[%c1, %c0_22, %c0_23] : memref<4x16x32xbf16, #tpu.memory_space<vmem>>, vector<1x16x32xbf16>
    %48 = vector.shape_cast %47 : vector<1x16x32xbf16> to vector<16x32xbf16>
    %c1_24 = arith.constant 1 : index
    %c0_25 = arith.constant 0 : index
    %c0_26 = arith.constant 0 : index
    %49 = vector.load %arg20[%c1_24, %c0_25, %c0_26] : memref<4x16x32xbf16, #tpu.memory_space<vmem>>, vector<1x16x32xbf16>
    %50 = vector.shape_cast %49 : vector<1x16x32xbf16> to vector<16x32xbf16>
    %cst_27 = arith.constant dense<0.000000e+00> : vector<16x16xf32>
    %51 = tpu.matmul %46, %48, %cst_27 {dimension_numbers = #tpu.dot_dimension_numbers<[1], [1], [0], [0], [0, 0, 1, 0], [], []>} : vector<16x32xbf16>, vector<16x32xbf16>, vector<16x16xf32> -> vector<16x16xf32>
    %cst_28 = arith.constant 0.176776692 : f32
    %52 = vector.broadcast %cst_28 : f32 to vector<16x16xf32>
    %53 = arith.mulf %51, %52 : vector<16x16xf32>
    %54 = vector.broadcast %22 : vector<1x16xf32> to vector<16x16xf32>
    %55 = arith.addf %53, %54 : vector<16x16xf32>
    %cst_29 = arith.constant dense<0xFF800000> : vector<16xf32>
    %56 = vector.multi_reduction <maximumf>, %55, %cst_29 [1] : vector<16x16xf32> to vector<16xf32>
    %57 = vector.shape_cast %56 : vector<16xf32> to vector<16x1xf32>
    %58 = vector.broadcast %57 : vector<16x1xf32> to vector<16x16xf32>
    %59 = arith.subf %55, %58 : vector<16x16xf32>
    %60 = math.exp %59 : vector<16x16xf32>
    %cst_30 = arith.constant dense<0.000000e+00> : vector<16xf32>
    %61 = vector.multi_reduction <add>, %60, %cst_30 [1] : vector<16x16xf32> to vector<16xf32>
    %62 = vector.shape_cast %61 : vector<16xf32> to vector<16x1xf32>
    %63 = tpu.reciprocal %62 {approx = true} : vector<16x1xf32> -> vector<16x1xf32>
    %64 = vector.broadcast %63 : vector<16x1xf32> to vector<16x16xf32>
    %65 = arith.mulf %60, %64 : vector<16x16xf32>
    %66 = arith.truncf %65 : vector<16x16xf32> to vector<16x16xbf16>
    %cst_31 = arith.constant dense<0.000000e+00> : vector<16x32xf32>
    %67 = tpu.matmul %66, %50, %cst_31 {dimension_numbers = #tpu.dot_dimension_numbers<[1], [0], [0], [1], [0, 0, 1, 1], [], []>} : vector<16x16xbf16>, vector<16x32xbf16>, vector<16x32xf32> -> vector<16x32xf32>
    %68 = arith.truncf %67 : vector<16x32xf32> to vector<16x32xbf16>
    %69 = vector.extract_strided_slice %20 {offsets = [0, 64], sizes = [16, 32], strides = [1, 1]} : vector<16x128xbf16> to vector<16x32xbf16>
    %c2 = arith.constant 2 : index
    %c0_32 = arith.constant 0 : index
    %c0_33 = arith.constant 0 : index
    %70 = vector.load %arg19[%c2, %c0_32, %c0_33] : memref<4x16x32xbf16, #tpu.memory_space<vmem>>, vector<1x16x32xbf16>
    %71 = vector.shape_cast %70 : vector<1x16x32xbf16> to vector<16x32xbf16>
    %c2_34 = arith.constant 2 : index
    %c0_35 = arith.constant 0 : index
    %c0_36 = arith.constant 0 : index
    %72 = vector.load %arg20[%c2_34, %c0_35, %c0_36] : memref<4x16x32xbf16, #tpu.memory_space<vmem>>, vector<1x16x32xbf16>
    %73 = vector.shape_cast %72 : vector<1x16x32xbf16> to vector<16x32xbf16>
    %cst_37 = arith.constant dense<0.000000e+00> : vector<16x16xf32>
    %74 = tpu.matmul %69, %71, %cst_37 {dimension_numbers = #tpu.dot_dimension_numbers<[1], [1], [0], [0], [0, 0, 1, 0], [], []>} : vector<16x32xbf16>, vector<16x32xbf16>, vector<16x16xf32> -> vector<16x16xf32>
    %cst_38 = arith.constant 0.176776692 : f32
    %75 = vector.broadcast %cst_38 : f32 to vector<16x16xf32>
    %76 = arith.mulf %74, %75 : vector<16x16xf32>
    %77 = vector.broadcast %22 : vector<1x16xf32> to vector<16x16xf32>
    %78 = arith.addf %76, %77 : vector<16x16xf32>
    %cst_39 = arith.constant dense<0xFF800000> : vector<16xf32>
    %79 = vector.multi_reduction <maximumf>, %78, %cst_39 [1] : vector<16x16xf32> to vector<16xf32>
    %80 = vector.shape_cast %79 : vector<16xf32> to vector<16x1xf32>
    %81 = vector.broadcast %80 : vector<16x1xf32> to vector<16x16xf32>
    %82 = arith.subf %78, %81 : vector<16x16xf32>
    %83 = math.exp %82 : vector<16x16xf32>
    %cst_40 = arith.constant dense<0.000000e+00> : vector<16xf32>
    %84 = vector.multi_reduction <add>, %83, %cst_40 [1] : vector<16x16xf32> to vector<16xf32>
    %85 = vector.shape_cast %84 : vector<16xf32> to vector<16x1xf32>
    %86 = tpu.reciprocal %85 {approx = true} : vector<16x1xf32> -> vector<16x1xf32>
    %87 = vector.broadcast %86 : vector<16x1xf32> to vector<16x16xf32>
    %88 = arith.mulf %83, %87 : vector<16x16xf32>
    %89 = arith.truncf %88 : vector<16x16xf32> to vector<16x16xbf16>
    %cst_41 = arith.constant dense<0.000000e+00> : vector<16x32xf32>
    %90 = tpu.matmul %89, %73, %cst_41 {dimension_numbers = #tpu.dot_dimension_numbers<[1], [0], [0], [1], [0, 0, 1, 1], [], []>} : vector<16x16xbf16>, vector<16x32xbf16>, vector<16x32xf32> -> vector<16x32xf32>
    %91 = arith.truncf %90 : vector<16x32xf32> to vector<16x32xbf16>
    %92 = vector.extract_strided_slice %20 {offsets = [0, 96], sizes = [16, 32], strides = [1, 1]} : vector<16x128xbf16> to vector<16x32xbf16>
    %c3 = arith.constant 3 : index
    %c0_42 = arith.constant 0 : index
    %c0_43 = arith.constant 0 : index
    %93 = vector.load %arg19[%c3, %c0_42, %c0_43] : memref<4x16x32xbf16, #tpu.memory_space<vmem>>, vector<1x16x32xbf16>
    %94 = vector.shape_cast %93 : vector<1x16x32xbf16> to vector<16x32xbf16>
    %c3_44 = arith.constant 3 : index
    %c0_45 = arith.constant 0 : index
    %c0_46 = arith.constant 0 : index
    %95 = vector.load %arg20[%c3_44, %c0_45, %c0_46] : memref<4x16x32xbf16, #tpu.memory_space<vmem>>, vector<1x16x32xbf16>
    %96 = vector.shape_cast %95 : vector<1x16x32xbf16> to vector<16x32xbf16>
    %cst_47 = arith.constant dense<0.000000e+00> : vector<16x16xf32>
    %97 = tpu.matmul %92, %94, %cst_47 {dimension_numbers = #tpu.dot_dimension_numbers<[1], [1], [0], [0], [0, 0, 1, 0], [], []>} : vector<16x32xbf16>, vector<16x32xbf16>, vector<16x16xf32> -> vector<16x16xf32>
    %cst_48 = arith.constant 0.176776692 : f32
    %98 = vector.broadcast %cst_48 : f32 to vector<16x16xf32>
    %99 = arith.mulf %97, %98 : vector<16x16xf32>
    %100 = vector.broadcast %22 : vector<1x16xf32> to vector<16x16xf32>
    %101 = arith.addf %99, %100 : vector<16x16xf32>
    %cst_49 = arith.constant dense<0xFF800000> : vector<16xf32>
    %102 = vector.multi_reduction <maximumf>, %101, %cst_49 [1] : vector<16x16xf32> to vector<16xf32>
    %103 = vector.shape_cast %102 : vector<16xf32> to vector<16x1xf32>
    %104 = vector.broadcast %103 : vector<16x1xf32> to vector<16x16xf32>
    %105 = arith.subf %101, %104 : vector<16x16xf32>
    %106 = math.exp %105 : vector<16x16xf32>
    %cst_50 = arith.constant dense<0.000000e+00> : vector<16xf32>
    %107 = vector.multi_reduction <add>, %106, %cst_50 [1] : vector<16x16xf32> to vector<16xf32>
    %108 = vector.shape_cast %107 : vector<16xf32> to vector<16x1xf32>
    %109 = tpu.reciprocal %108 {approx = true} : vector<16x1xf32> -> vector<16x1xf32>
    %110 = vector.broadcast %109 : vector<16x1xf32> to vector<16x16xf32>
    %111 = arith.mulf %106, %110 : vector<16x16xf32>
    %112 = arith.truncf %111 : vector<16x16xf32> to vector<16x16xbf16>
    %cst_51 = arith.constant dense<0.000000e+00> : vector<16x32xf32>
    %113 = tpu.matmul %112, %96, %cst_51 {dimension_numbers = #tpu.dot_dimension_numbers<[1], [0], [0], [1], [0, 0, 1, 1], [], []>} : vector<16x16xbf16>, vector<16x32xbf16>, vector<16x32xf32> -> vector<16x32xf32>
    %114 = arith.truncf %113 : vector<16x32xf32> to vector<16x32xbf16>
    %115 = tpu.concatenate %45, %68, %91, %114 in 1 : vector<16x32xbf16>, vector<16x32xbf16>, vector<16x32xbf16>, vector<16x32xbf16> -> vector<16x128xbf16>
    %c0_52 = arith.constant 0 : index
    %c0_53 = arith.constant 0 : index
    %116 = vector.load %arg15[%c0_52, %c0_53] : memref<128x64xbf16, #tpu.memory_space<vmem>>, vector<128x64xbf16>
    %cst_54 = arith.constant dense<0.000000e+00> : vector<16x64xf32>
    %117 = tpu.matmul %115, %116, %cst_54 {dimension_numbers = #tpu.dot_dimension_numbers<[1], [0], [0], [1], [0, 0, 1, 1], [], []>} : vector<16x128xbf16>, vector<128x64xbf16>, vector<16x64xf32> -> vector<16x64xf32>
    %118 = arith.truncf %117 : vector<16x64xf32> to vector<16x64xbf16>
    %c0_55 = arith.constant 0 : index
    %c0_56 = arith.constant 0 : index
    %119 = vector.load %arg16[%c0_55, %c0_56] : memref<64x128xbf16, #tpu.memory_space<vmem>>, vector<64x128xbf16>
    %cst_57 = arith.constant dense<0.000000e+00> : vector<16x128xf32>
    %120 = tpu.matmul %118, %119, %cst_57 {dimension_numbers = #tpu.dot_dimension_numbers<[1], [0], [0], [1], [0, 0, 1, 1], [], []>} : vector<16x64xbf16>, vector<64x128xbf16>, vector<16x128xf32> -> vector<16x128xf32>
    %c0_58 = arith.constant 0 : index
    %c0_59 = arith.constant 0 : index
    %c0_60 = arith.constant 0 : index
    %121 = vector.load %arg17[%c0_58, %c0_59, %c0_60] : memref<1x16x128xf32, #tpu.memory_space<vmem>>, vector<1x16x128xf32>
    %122 = vector.shape_cast %121 : vector<1x16x128xf32> to vector<16x128xf32>
    %123 = vector.shape_cast %120 : vector<16x128xf32> to vector<1x16x128xf32>
    tpu.vector_store %arg17[%c0_58, %c0_59, %c0_60], %123 {strides = array<i32>} : memref<1x16x128xf32, #tpu.memory_space<vmem>>, vector<1x16x128xf32>,
    return
  }
  func.func @transform_0(%arg0: i32, %arg1: i32) -> (i32, i32, i32) {
    %c0_i32 = arith.constant 0 : i32
    %c0_i32_0 = arith.constant 0 : i32
    %c0_i32_1 = arith.constant 0 : i32
    return %arg0, %c0_i32, %c0_i32_0 : i32, i32, i32
  }
  func.func @transform_1(%arg0: i32, %arg1: i32) -> (i32, i32) {
    %c0_i32 = arith.constant 0 : i32
    %c0_i32_0 = arith.constant 0 : i32
    %c0_i32_1 = arith.constant 0 : i32
    return %c0_i32, %c0_i32_0 : i32, i32
  }
  func.func @transform_2(%arg0: i32, %arg1: i32) -> (i32, i32) {
    %c0_i32 = arith.constant 0 : i32
    %c0_i32_0 = arith.constant 0 : i32
    %c0_i32_1 = arith.constant 0 : i32
    return %c0_i32, %c0_i32_0 : i32, i32
  }
  func.func @transform_3(%arg0: i32, %arg1: i32) -> (i32, i32, i32) {
    %c0_i32 = arith.constant 0 : i32
    %c0_i32_0 = arith.constant 0 : i32
    %c0_i32_1 = arith.constant 0 : i32
    return %arg0, %c0_i32, %c0_i32_0 : i32, i32, i32
  }
  func.func @transform_4(%arg0: i32, %arg1: i32) -> (i32, i32) {
    %c0_i32 = arith.constant 0 : i32
    %c0_i32_0 = arith.constant 0 : i32
    %c0_i32_1 = arith.constant 0 : i32
    return %c0_i32, %c0_i32_0 : i32, i32
  }
  func.func @transform_5(%arg0: i32, %arg1: i32) -> (i32, i32) {
    %c0_i32 = arith.constant 0 : i32
    %c0_i32_0 = arith.constant 0 : i32
    %c0_i32_1 = arith.constant 0 : i32
    return %c0_i32, %c0_i32_0 : i32, i32
  }
  func.func @transform_6(%arg0: i32, %arg1: i32) -> (i32, i32) {
    %c0_i32 = arith.constant 0 : i32
    %c0_i32_0 = arith.constant 0 : i32
    %c0_i32_1 = arith.constant 0 : i32
    return %c0_i32, %c0_i32_0 : i32, i32
  }
  func.func @transform_7(%arg0: i32, %arg1: i32) -> (i32, i32) {
    %c0_i32 = arith.constant 0 : i32
    %c0_i32_0 = arith.constant 0 : i32
    %c0_i32_1 = arith.constant 0 : i32
    return %c0_i32, %c0_i32_0 : i32, i32
  }
  func.func @transform_8(%arg0: i32, %arg1: i32) -> (i32, i32) {
    %c0_i32 = arith.constant 0 : i32
    %c0_i32_0 = arith.constant 0 : i32
    %c0_i32_1 = arith.constant 0 : i32
    return %c0_i32, %c0_i32_0 : i32, i32
  }
  func.func @transform_9(%arg0: i32, %arg1: i32) -> (i32, i32) {
    %c0_i32 = arith.constant 0 : i32
    %c0_i32_0 = arith.constant 0 : i32
    %c0_i32_1 = arith.constant 0 : i32
    return %c0_i32, %c0_i32_0 : i32, i32
  }
  func.func @transform_10(%arg0: i32, %arg1: i32) -> (i32, i32) {
    %c0_i32 = arith.constant 0 : i32
    %c0_i32_0 = arith.constant 0 : i32
    %c0_i32_1 = arith.constant 0 : i32
    return %c0_i32, %c0_i32_0 : i32, i32
  }
  func.func @transform_11(%arg0: i32, %arg1: i32) -> (i32, i32) {
    %c0_i32 = arith.constant 0 : i32
    %c0_i32_0 = arith.constant 0 : i32
    %c0_i32_1 = arith.constant 0 : i32
    return %c0_i32, %c0_i32_0 : i32, i32
  }
  func.func @transform_12(%arg0: i32, %arg1: i32) -> (i32, i32) {
    %c0_i32 = arith.constant 0 : i32
    %c0_i32_0 = arith.constant 0 : i32
    %c0_i32_1 = arith.constant 0 : i32
    return %c0_i32, %c0_i32_0 : i32, i32
  }
  func.func @transform_13(%arg0: i32, %arg1: i32) -> (i32, i32) {
    %c0_i32 = arith.constant 0 : i32
    %c0_i32_0 = arith.constant 0 : i32
    %c0_i32_1 = arith.constant 0 : i32
    return %c0_i32, %c0_i32_0 : i32, i32
  }
  func.func @transform_14(%arg0: i32, %arg1: i32) -> (i32, i32) {
    %c0_i32 = arith.constant 0 : i32
    %c0_i32_0 = arith.constant 0 : i32
    %c0_i32_1 = arith.constant 0 : i32
    return %c0_i32, %c0_i32_0 : i32, i32
  }
  func.func @transform_15(%arg0: i32, %arg1: i32) -> (i32, i32, i32) {
    %c0_i32 = arith.constant 0 : i32
    %c0_i32_0 = arith.constant 0 : i32
    return %arg0, %arg1, %c0_i32 : i32, i32, i32
  }
}

</mosaic_0001>

<llo_original>
// kernel: tpu_custom_call.1
$region0: #{tpu_custom_call.1}
  #allocation0 [shape = 'u32[]', space=smem, size = 0x4, offset = 0x4, fixed_abs, tag = 'smem constant byte address 0x4 - core index']
  #allocation1 [shape = 'u32[144,128]{1,0:T(1,128)}', space=vmem, size = 0x12000, scoped, tag = 'internal scratch']
  #allocation2 [shape = 'bf16[16,64]{1,0:T(16,128)(2,1)}', space=vmem, size = 0x1000, scoped, tag = 'scratch operand']
  #allocation3 [shape = 'bf16[4,16,32]{2,1,0:T(16,128)(2,1)}', space=vmem, size = 0x4000, scoped, tag = 'scratch operand']
  #allocation4 [shape = 'bf16[4,16,32]{2,1,0:T(16,128)(2,1)}', space=vmem, size = 0x4000, scoped, tag = 'scratch operand']
  %s0 = inlined_call_operand.hbm [shape: bf16[2,16,128], index: 0, kind: input, shape index: {}]
  %s1 = inlined_call_operand.hbm [shape: bf16[16,128], index: 1, kind: input, shape index: {}]
  %s2 = inlined_call_operand.hbm [shape: bf16[16,128], index: 2, kind: input, shape index: {}]
  %s3 = inlined_call_operand.hbm [shape: f32[2,1,16], index: 3, kind: input, shape index: {}]
  %s4 = inlined_call_operand.hbm [shape: bf16[128,64], index: 4, kind: input, shape index: {}]
  %s5 = inlined_call_operand.hbm [shape: bf16[128,64], index: 5, kind: input, shape index: {}]
  %s6 = inlined_call_operand.hbm [shape: f32[1,64], index: 6, kind: input, shape index: {}]
  %s7 = inlined_call_operand.hbm [shape: f32[1,64], index: 7, kind: input, shape index: {}]
  %s8 = inlined_call_operand.hbm [shape: bf16[64,128], index: 8, kind: input, shape index: {}]
  %s9 = inlined_call_operand.hbm [shape: bf16[64,128], index: 9, kind: input, shape index: {}]
  %s10 = inlined_call_operand.hbm [shape: bf16[64,128], index: 10, kind: input, shape index: {}]
  %s11 = inlined_call_operand.hbm [shape: bf16[64,128], index: 11, kind: input, shape index: {}]
  %s12 = inlined_call_operand.hbm [shape: bf16[64,128], index: 12, kind: input, shape index: {}]
  %s13 = inlined_call_operand.hbm [shape: bf16[128,64], index: 13, kind: input, shape index: {}]
  %s14 = inlined_call_operand.hbm [shape: bf16[64,128], index: 14, kind: input, shape index: {}]
  %s15 = inlined_call_operand.hbm [shape: f32[2,16,128], index: 15, kind: output, shape index: {}]
  %s16 = sld [smem:[#allocation0]]
  $region157: #{tpu_custom_call.1} parent=0
    _
  %s18 = ssub.s32 1, %s16
  %s19 = scalar_select 0, %s18, %s16
  $region1: #{tpu_custom_call.1} parent=0
    #allocation5 [shape = 'u8[8192]{0}', space=vmem, size = 0x2000, scoped, tag = 'input window, operand 0']
    #allocation6 [shape = 's32[2]{0}', space=sflag, size = 0x8, scoped, tag = 'scoped memory for tpu_custom_call.1']
    #allocation7 [shape = 's32[2]{0}', space=sflag, size = 0x8, scoped, tag = 'scoped memory for tpu_custom_call.1']
    #allocation8 [shape = 'u8[4096]{0}', space=vmem, size = 0x1000, scoped, tag = 'input window, operand 1, single buffered']
    #allocation9 [shape = 's32[1]{0}', space=sflag, size = 0x4, scoped, tag = 'scoped memory for tpu_custom_call.1']
    #allocation10 [shape = 'u8[4096]{0}', space=vmem, size = 0x1000, scoped, tag = 'input window, operand 2, single buffered']
    #allocation11 [shape = 'u8[1024]{0}', space=vmem, size = 0x400, scoped, tag = 'input window, operand 3']
    #allocation12 [shape = 's32[2]{0}', space=sflag, size = 0x8, scoped, tag = 'scoped memory for tpu_custom_call.1']
    #allocation13 [shape = 'u8[32768]{0}', space=vmem, size = 0x8000, scoped, tag = 'input window, operand 4, single buffered']
    #allocation14 [shape = 'u8[32768]{0}', space=vmem, size = 0x8000, scoped, tag = 'input window, operand 5, single buffered']
    #allocation15 [shape = 's32[1]{0}', space=sflag, size = 0x4, scoped, tag = 'scoped memory for tpu_custom_call.1']
    #allocation16 [shape = 'u8[512]{0}', space=vmem, size = 0x400, scoped, tag = 'input window, operand 6, single buffered']
    #allocation17 [shape = 'u8[512]{0}', space=vmem, size = 0x400, scoped, tag = 'input window, operand 7, single buffered']
    #allocation18 [shape = 's32[1]{0}', space=sflag, size = 0x4, scoped, tag = 'scoped memory for tpu_custom_call.1']
    #allocation19 [shape = 'u8[16384]{0}', space=vmem, size = 0x4000, scoped, tag = 'input window, operand 8, single buffered']
    #allocation20 [shape = 'u8[16384]{0}', space=vmem, size = 0x4000, scoped, tag = 'input window, operand 9, single buffered']
    #allocation21 [shape = 's32[1]{0}', space=sflag, size = 0x4, scoped, tag = 'scoped memory for tpu_custom_call.1']
    #allocation22 [shape = 'u8[16384]{0}', space=vmem, size = 0x4000, scoped, tag = 'input window, operand 10, single buffered']
    #allocation23 [shape = 'u8[16384]{0}', space=vmem, size = 0x4000, scoped, tag = 'input window, operand 11, single buffered']
    #allocation24 [shape = 's32[1]{0}', space=sflag, size = 0x4, scoped, tag = 'scoped memory for tpu_custom_call.1']
    #allocation25 [shape = 'u8[16384]{0}', space=vmem, size = 0x4000, scoped, tag = 'input window, operand 12, single buffered']
    #allocation26 [shape = 'u8[32768]{0}', space=vmem, size = 0x8000, scoped, tag = 'input window, operand 13, single buffered']
    #allocation27 [shape = 's32[1]{0}', space=sflag, size = 0x4, scoped, tag = 'scoped memory for tpu_custom_call.1']
    #allocation28 [shape = 'u8[16384]{0}', space=vmem, size = 0x4000, scoped, tag = 'input window, operand 14, single buffered']
    #allocation29 [shape = 'u8[16384]{0}', space=vmem, size = 0x4000, scoped, tag = 'output window, operand 0']
    %20 = vsyncpa [#allocation6], 0
    %s21 = scalar_lea.sflag [#allocation6], 1
    %22 = vsyncpa %s21, 0
    %23 = vsyncpa [#allocation9], 0
    %24 = vsyncpa [#allocation12], 0
    %s25 = scalar_lea.sflag [#allocation12], 1
    %26 = vsyncpa %s25, 0
    %27 = vsyncpa [#allocation15], 0
    %28 = vsyncpa [#allocation18], 0
    %29 = vsyncpa [#allocation21], 0
    %30 = vsyncpa [#allocation24], 0
    %31 = vsyncpa [#allocation27], 0
    %32 = vsyncpa [#allocation7], 0
    %s33 = scalar_lea.sflag [#allocation7], 1
    %34 = vsyncpa %s33, 0
    loop: start=0, step=1, limit=4
    $region2: #{tpu_custom_call.1} parent=1 // loop_pre_header
      _
    $region3: #{tpu_custom_call.1} parent=1 // loop_header
      %s36 = sphi 0, %s40
      %p37 = scmp.ge.s32.totalorder %s36, 4
      %s43 = sphi 0, %s55
      %s44 = sphi 0, %s51
      %s45 = sphi 0, %s43
      %s46 = sphi 0, %s44
      %s47 = sphi 0, %s45
      %s48 = sphi 0, %s46
      %s58 = sphi 0, %s60
      %s61 = sphi 0, %s58
      %s62 = sphi 0, %s61
      %s78 = sphi 0, %s62
      %s82 = sphi 0, %s82
      %s84 = sphi 0, %s82
      %s85 = sphi 0, %s84
      %s99 = sphi 0, %s85
      %s103 = sphi 0, %s103
      %s105 = sphi 0, %s103
      %s106 = sphi 0, %s105
      %s120 = sphi 0, %s106
      %s126 = sphi 0, %s128
      %s129 = sphi 0, %s126
      %s130 = sphi 0, %s129
      %s146 = sphi 0, %s130
      %s150 = sphi 0, %s150
      %s152 = sphi 0, %s150
      %s153 = sphi 0, %s152
      %s167 = sphi 0, %s153
      %s171 = sphi 0, %s171
      %s173 = sphi 0, %s171
      %s174 = sphi 0, %s173
      %s188 = sphi 0, %s174
      %s192 = sphi 0, %s192
      %s194 = sphi 0, %s192
      %s195 = sphi 0, %s194
      %s209 = sphi 0, %s195
      %s213 = sphi 0, %s213
      %s215 = sphi 0, %s213
      %s216 = sphi 0, %s215
      %s230 = sphi 0, %s216
      %s234 = sphi 0, %s234
      %s236 = sphi 0, %s234
      %s237 = sphi 0, %s236
      %s251 = sphi 0, %s237
      %s255 = sphi 0, %s255
      %s257 = sphi 0, %s255
      %s258 = sphi 0, %s257
      %s272 = sphi 0, %s258
      %s276 = sphi 0, %s276
      %s278 = sphi 0, %s276
      %s279 = sphi 0, %s278
      %s293 = sphi 0, %s279
      %s297 = sphi 0, %s297
      %s299 = sphi 0, %s297
      %s300 = sphi 0, %s299
      %s314 = sphi 0, %s300
      %s318 = sphi 0, %s318
      %s320 = sphi 0, %s318
      %s321 = sphi 0, %s320
      %s335 = sphi 0, %s321
      %s339 = sphi 0, %s339
      %s341 = sphi 0, %s339
      %s342 = sphi 0, %s341
      %s356 = sphi 0, %s342
      %s360 = sphi 0, %s360
      %s362 = sphi 0, %s360
      %s363 = sphi 0, %s362
      %s377 = sphi 0, %s363
      %s385 = sphi 0, %s387
      %s388 = sphi 0, %s385
      %s389 = sphi 0, %s388
      %s405 = sphi 0, %s389
    $region4: #{tpu_custom_call.1} parent=1 // loop_header_branch
      %39 = sbr.rel (%p37) target = $region8
    $region5: #{tpu_custom_call.1} parent=1 // loop_body
      %s41 = ssub.s32 %s36, 1
      %s42 = ssub.s32 %s36, 2
      %s49 = sadd.s32 1, %s44
      %p50 = scmp.ge.s32.totalorder %s49, 1
      %s51 = scalar_select %p50, 0, %s49
      %s52 = sadd.s32 1, %s43
      %s53 = scalar_select %p50, %s52, %s43
      %p54 = scmp.ge.s32.totalorder %s53, 2
      %s55 = scalar_select %p54, 0, %s53
      %s56 = ssub.s32 %s43, %s55
      %p57 = scmp.eq.s32.totalorder %s56, 0
      %s59 = sadd.s32 %s58, 1
      %s60 = scalar_select %p57, %s58, %s59
      %p63 = pneg %p57
      %p64 = scmp.eq.s32.totalorder %s36, 1
      %p65 = por %p63, %p64
      %p66 = scmp.ne.s32.totalorder %s58, %s61
      %p67 = scmp.eq.s32.totalorder %s36, 0
      %p68 = por %p66, %p67
      %p69 = scmp.ne.s32.totalorder %s58, %s61
      %p70 = scmp.eq.s32.totalorder %s41, 1
      %p71 = por %p69, %p70
      %p72 = scmp.ne.s32.totalorder %s61, %s62
      %p73 = scmp.eq.s32.totalorder %s41, 0
      %p74 = por %p72, %p73
      %p75 = scmp.ne.s32.totalorder %s61, %s62
      %p76 = scmp.eq.s32.totalorder %s42, 1
      %p77 = por %p75, %p76
      %p79 = scmp.ne.s32.totalorder %s62, %s78
      %p80 = scmp.eq.s32.totalorder %s42, 0
      %p81 = por %p79, %p80
      %s83 = sadd.s32 %s82, 1
      %p86 = scmp.eq.s32.totalorder %s36, 1
      %p87 = scmp.ne.s32.totalorder %s82, %s84
      %p88 = scmp.eq.s32.totalorder %s36, 0
      %p89 = por %p87, %p88
      %p90 = scmp.ne.s32.totalorder %s82, %s84
      %p91 = scmp.eq.s32.totalorder %s41, 1
      %p92 = por %p90, %p91
      %p93 = scmp.ne.s32.totalorder %s84, %s85
      %p94 = scmp.eq.s32.totalorder %s41, 0
      %p95 = por %p93, %p94
      %p96 = scmp.ne.s32.totalorder %s84, %s85
      %p97 = scmp.eq.s32.totalorder %s42, 1
      %p98 = por %p96, %p97
      %p100 = scmp.ne.s32.totalorder %s85, %s99
      %p101 = scmp.eq.s32.totalorder %s42, 0
      %p102 = por %p100, %p101
      %s104 = sadd.s32 %s103, 1
      %p107 = scmp.eq.s32.totalorder %s36, 1
      %p108 = scmp.ne.s32.totalorder %s103, %s105
      %p109 = scmp.eq.s32.totalorder %s36, 0
      %p110 = por %p108, %p109
      %p111 = scmp.ne.s32.totalorder %s103, %s105
      %p112 = scmp.eq.s32.totalorder %s41, 1
      %p113 = por %p111, %p112
      %p114 = scmp.ne.s32.totalorder %s105, %s106
      %p115 = scmp.eq.s32.totalorder %s41, 0
      %p116 = por %p114, %p115
      %p117 = scmp.ne.s32.totalorder %s105, %s106
      %p118 = scmp.eq.s32.totalorder %s42, 1
      %p119 = por %p117, %p118
      %p121 = scmp.ne.s32.totalorder %s106, %s120
      %p122 = scmp.eq.s32.totalorder %s42, 0
      %p123 = por %p121, %p122
      %s124 = ssub.s32 %s43, %s55
      %p125 = scmp.eq.s32.totalorder %s124, 0
      %s127 = sadd.s32 %s126, 1
      %s128 = scalar_select %p125, %s126, %s127
      %p131 = pneg %p125
      %p132 = scmp.eq.s32.totalorder %s36, 1
      %p133 = por %p131, %p132
      %p134 = scmp.ne.s32.totalorder %s126, %s129
      %p135 = scmp.eq.s32.totalorder %s36, 0
      %p136 = por %p134, %p135
      %p137 = scmp.ne.s32.totalorder %s126, %s129
      %p138 = scmp.eq.s32.totalorder %s41, 1
      %p139 = por %p137, %p138
      %p140 = scmp.ne.s32.totalorder %s129, %s130
      %p141 = scmp.eq.s32.totalorder %s41, 0
      %p142 = por %p140, %p141
      %p143 = scmp.ne.s32.totalorder %s129, %s130
      %p144 = scmp.eq.s32.totalorder %s42, 1
      %p145 = por %p143, %p144
      %p147 = scmp.ne.s32.totalorder %s130, %s146
      %p148 = scmp.eq.s32.totalorder %s42, 0
      %p149 = por %p147, %p148
      %s151 = sadd.s32 %s150, 1
      %p154 = scmp.eq.s32.totalorder %s36, 1
      %p155 = scmp.ne.s32.totalorder %s150, %s152
      %p156 = scmp.eq.s32.totalorder %s36, 0
      %p157 = por %p155, %p156
      %p158 = scmp.ne.s32.totalorder %s150, %s152
      %p159 = scmp.eq.s32.totalorder %s41, 1
      %p160 = por %p158, %p159
      %p161 = scmp.ne.s32.totalorder %s152, %s153
      %p162 = scmp.eq.s32.totalorder %s41, 0
      %p163 = por %p161, %p162
      %p164 = scmp.ne.s32.totalorder %s152, %s153
      %p165 = scmp.eq.s32.totalorder %s42, 1
      %p166 = por %p164, %p165
      %p168 = scmp.ne.s32.totalorder %s153, %s167
      %p169 = scmp.eq.s32.totalorder %s42, 0
      %p170 = por %p168, %p169
      %s172 = sadd.s32 %s171, 1
      %p175 = scmp.eq.s32.totalorder %s36, 1
      %p176 = scmp.ne.s32.totalorder %s171, %s173
      %p177 = scmp.eq.s32.totalorder %s36, 0
      %p178 = por %p176, %p177
      %p179 = scmp.ne.s32.totalorder %s171, %s173
      %p180 = scmp.eq.s32.totalorder %s41, 1
      %p181 = por %p179, %p180
      %p182 = scmp.ne.s32.totalorder %s173, %s174
      %p183 = scmp.eq.s32.totalorder %s41, 0
      %p184 = por %p182, %p183
      %p185 = scmp.ne.s32.totalorder %s173, %s174
      %p186 = scmp.eq.s32.totalorder %s42, 1
      %p187 = por %p185, %p186
      %p189 = scmp.ne.s32.totalorder %s174, %s188
      %p190 = scmp.eq.s32.totalorder %s42, 0
      %p191 = por %p189, %p190
      %s193 = sadd.s32 %s192, 1
      %p196 = scmp.eq.s32.totalorder %s36, 1
      %p197 = scmp.ne.s32.totalorder %s192, %s194
      %p198 = scmp.eq.s32.totalorder %s36, 0
      %p199 = por %p197, %p198
      %p200 = scmp.ne.s32.totalorder %s192, %s194
      %p201 = scmp.eq.s32.totalorder %s41, 1
      %p202 = por %p200, %p201
      %p203 = scmp.ne.s32.totalorder %s194, %s195
      %p204 = scmp.eq.s32.totalorder %s41, 0
      %p205 = por %p203, %p204
      %p206 = scmp.ne.s32.totalorder %s194, %s195
      %p207 = scmp.eq.s32.totalorder %s42, 1
      %p208 = por %p206, %p207
      %p210 = scmp.ne.s32.totalorder %s195, %s209
      %p211 = scmp.eq.s32.totalorder %s42, 0
      %p212 = por %p210, %p211
      %s214 = sadd.s32 %s213, 1
      %p217 = scmp.eq.s32.totalorder %s36, 1
      %p218 = scmp.ne.s32.totalorder %s213, %s215
      %p219 = scmp.eq.s32.totalorder %s36, 0
      %p220 = por %p218, %p219
      %p221 = scmp.ne.s32.totalorder %s213, %s215
      %p222 = scmp.eq.s32.totalorder %s41, 1
      %p223 = por %p221, %p222
      %p224 = scmp.ne.s32.totalorder %s215, %s216
      %p225 = scmp.eq.s32.totalorder %s41, 0
      %p226 = por %p224, %p225
      %p227 = scmp.ne.s32.totalorder %s215, %s216
      %p228 = scmp.eq.s32.totalorder %s42, 1
      %p229 = por %p227, %p228
      %p231 = scmp.ne.s32.totalorder %s216, %s230
      %p232 = scmp.eq.s32.totalorder %s42, 0
      %p233 = por %p231, %p232
      %s235 = sadd.s32 %s234, 1
      %p238 = scmp.eq.s32.totalorder %s36, 1
      %p239 = scmp.ne.s32.totalorder %s234, %s236
      %p240 = scmp.eq.s32.totalorder %s36, 0
      %p241 = por %p239, %p240
      %p242 = scmp.ne.s32.totalorder %s234, %s236
      %p243 = scmp.eq.s32.totalorder %s41, 1
      %p244 = por %p242, %p243
      %p245 = scmp.ne.s32.totalorder %s236, %s237
      %p246 = scmp.eq.s32.totalorder %s41, 0
      %p247 = por %p245, %p246
      %p248 = scmp.ne.s32.totalorder %s236, %s237
      %p249 = scmp.eq.s32.totalorder %s42, 1
      %p250 = por %p248, %p249
      %p252 = scmp.ne.s32.totalorder %s237, %s251
      %p253 = scmp.eq.s32.totalorder %s42, 0
      %p254 = por %p252, %p253
      %s256 = sadd.s32 %s255, 1
      %p259 = scmp.eq.s32.totalorder %s36, 1
      %p260 = scmp.ne.s32.totalorder %s255, %s257
      %p261 = scmp.eq.s32.totalorder %s36, 0
      %p262 = por %p260, %p261
      %p263 = scmp.ne.s32.totalorder %s255, %s257
      %p264 = scmp.eq.s32.totalorder %s41, 1
      %p265 = por %p263, %p264
      %p266 = scmp.ne.s32.totalorder %s257, %s258
      %p267 = scmp.eq.s32.totalorder %s41, 0
      %p268 = por %p266, %p267
      %p269 = scmp.ne.s32.totalorder %s257, %s258
      %p270 = scmp.eq.s32.totalorder %s42, 1
      %p271 = por %p269, %p270
      %p273 = scmp.ne.s32.totalorder %s258, %s272
      %p274 = scmp.eq.s32.totalorder %s42, 0
      %p275 = por %p273, %p274
      %s277 = sadd.s32 %s276, 1
      %p280 = scmp.eq.s32.totalorder %s36, 1
      %p281 = scmp.ne.s32.totalorder %s276, %s278
      %p282 = scmp.eq.s32.totalorder %s36, 0
      %p283 = por %p281, %p282
      %p284 = scmp.ne.s32.totalorder %s276, %s278
      %p285 = scmp.eq.s32.totalorder %s41, 1
      %p286 = por %p284, %p285
      %p287 = scmp.ne.s32.totalorder %s278, %s279
      %p288 = scmp.eq.s32.totalorder %s41, 0
      %p289 = por %p287, %p288
      %p290 = scmp.ne.s32.totalorder %s278, %s279
      %p291 = scmp.eq.s32.totalorder %s42, 1
      %p292 = por %p290, %p291
      %p294 = scmp.ne.s32.totalorder %s279, %s293
      %p295 = scmp.eq.s32.totalorder %s42, 0
      %p296 = por %p294, %p295
      %s298 = sadd.s32 %s297, 1
      %p301 = scmp.eq.s32.totalorder %s36, 1
      %p302 = scmp.ne.s32.totalorder %s297, %s299
      %p303 = scmp.eq.s32.totalorder %s36, 0
      %p304 = por %p302, %p303
      %p305 = scmp.ne.s32.totalorder %s297, %s299
      %p306 = scmp.eq.s32.totalorder %s41, 1
      %p307 = por %p305, %p306
      %p308 = scmp.ne.s32.totalorder %s299, %s300
      %p309 = scmp.eq.s32.totalorder %s41, 0
      %p310 = por %p308, %p309
      %p311 = scmp.ne.s32.totalorder %s299, %s300
      %p312 = scmp.eq.s32.totalorder %s42, 1
      %p313 = por %p311, %p312
      %p315 = scmp.ne.s32.totalorder %s300, %s314
      %p316 = scmp.eq.s32.totalorder %s42, 0
      %p317 = por %p315, %p316
      %s319 = sadd.s32 %s318, 1
      %p322 = scmp.eq.s32.totalorder %s36, 1
      %p323 = scmp.ne.s32.totalorder %s318, %s320
      %p324 = scmp.eq.s32.totalorder %s36, 0
      %p325 = por %p323, %p324
      %p326 = scmp.ne.s32.totalorder %s318, %s320
      %p327 = scmp.eq.s32.totalorder %s41, 1
      %p328 = por %p326, %p327
      %p329 = scmp.ne.s32.totalorder %s320, %s321
      %p330 = scmp.eq.s32.totalorder %s41, 0
      %p331 = por %p329, %p330
      %p332 = scmp.ne.s32.totalorder %s320, %s321
      %p333 = scmp.eq.s32.totalorder %s42, 1
      %p334 = por %p332, %p333
      %p336 = scmp.ne.s32.totalorder %s321, %s335
      %p337 = scmp.eq.s32.totalorder %s42, 0
      %p338 = por %p336, %p337
      %s340 = sadd.s32 %s339, 1
      %p343 = scmp.eq.s32.totalorder %s36, 1
      %p344 = scmp.ne.s32.totalorder %s339, %s341
      %p345 = scmp.eq.s32.totalorder %s36, 0
      %p346 = por %p344, %p345
      %p347 = scmp.ne.s32.totalorder %s339, %s341
      %p348 = scmp.eq.s32.totalorder %s41, 1
      %p349 = por %p347, %p348
      %p350 = scmp.ne.s32.totalorder %s341, %s342
      %p351 = scmp.eq.s32.totalorder %s41, 0
      %p352 = por %p350, %p351
      %p353 = scmp.ne.s32.totalorder %s341, %s342
      %p354 = scmp.eq.s32.totalorder %s42, 1
      %p355 = por %p353, %p354
      %p357 = scmp.ne.s32.totalorder %s342, %s356
      %p358 = scmp.eq.s32.totalorder %s42, 0
      %p359 = por %p357, %p358
      %s361 = sadd.s32 %s360, 1
      %p364 = scmp.eq.s32.totalorder %s36, 1
      %p365 = scmp.ne.s32.totalorder %s360, %s362
      %p366 = scmp.eq.s32.totalorder %s36, 0
      %p367 = por %p365, %p366
      %p368 = scmp.ne.s32.totalorder %s360, %s362
      %p369 = scmp.eq.s32.totalorder %s41, 1
      %p370 = por %p368, %p369
      %p371 = scmp.ne.s32.totalorder %s362, %s363
      %p372 = scmp.eq.s32.totalorder %s41, 0
      %p373 = por %p371, %p372
      %p374 = scmp.ne.s32.totalorder %s362, %s363
      %p375 = scmp.eq.s32.totalorder %s42, 1
      %p376 = por %p374, %p375
      %p378 = scmp.ne.s32.totalorder %s363, %s377
      %p379 = scmp.eq.s32.totalorder %s42, 0
      %p380 = por %p378, %p379
      %s381 = ssub.s32 %s43, %s55
      %s382 = ssub.s32 %s44, %s51
      %s383 = sor.u32 %s381, %s382
      %p384 = scmp.eq.s32.totalorder %s383, 0
      %s386 = sadd.s32 %s385, 1
      %s387 = scalar_select %p384, %s385, %s386
      %p390 = pneg %p384
      %p391 = scmp.eq.s32.totalorder %s36, 1
      %p392 = por %p390, %p391
      %p393 = scmp.ne.s32.totalorder %s385, %s388
      %p394 = scmp.eq.s32.totalorder %s36, 0
      %p395 = por %p393, %p394
      %p396 = scmp.ne.s32.totalorder %s385, %s388
      %p397 = scmp.eq.s32.totalorder %s41, 1
      %p398 = por %p396, %p397
      %p399 = scmp.ne.s32.totalorder %s388, %s389
      %p400 = scmp.eq.s32.totalorder %s41, 0
      %p401 = por %p399, %p400
      %p402 = scmp.ne.s32.totalorder %s388, %s389
      %p403 = scmp.eq.s32.totalorder %s42, 1
      %p404 = por %p402, %p403
      %p406 = scmp.ne.s32.totalorder %s389, %s405
      %p407 = scmp.eq.s32.totalorder %s42, 0
      %p408 = por %p406, %p407
      %p409 = scmp.le.s32.totalorder 1, %s36
      %p410 = scmp.lt.s32.totalorder %s36, 3
      %p411 = pnand %p409, %p410
      %p412 = pneg %p411
      // Predicated region
      $region9: #{tpu_custom_call.1} parent=5 // pred_check
        _
      $region10: #{tpu_custom_call.1} parent=5 // pred_check_branch
        %414 = sbr.rel (%p411) target = $region12
      $region11: #{tpu_custom_call.1} parent=5 // pred_region
        %s415 = ssub.s32 %s36, 1
        // Predicated region
        $region13: #{tpu_custom_call.1} parent=11 // pred_check
          %p416 = pneg %p95
        $region14: #{tpu_custom_call.1} parent=11 // pred_check_branch
          %418 = sbr.rel (%p416) target = $region16
        $region15: #{tpu_custom_call.1} parent=11 // pred_region
          %s420 = ssub.s32 128, 128
          %421 = vsyncadd [#allocation9], %s420
          %s422 = sshll.u32 [#allocation8], 4
          %s423 = int_to_ptr.vmem [resolvable:$true] %s422
          %428 = dma.hbm_to_vmem [thread:$0]  %s1, 128, %s423, [#allocation9], 64, 64, 4
        $region16: #{tpu_custom_call.1} parent=11 // pred_fallthru
          _
        // Predicated region
        $region17: #{tpu_custom_call.1} parent=11 // pred_check
          %p429 = pneg %p116
        $region18: #{tpu_custom_call.1} parent=11 // pred_check_branch
          %431 = sbr.rel (%p429) target = $region20
        $region19: #{tpu_custom_call.1} parent=11 // pred_region
          %s433 = ssub.s32 128, 128
          %434 = vsyncadd [#allocation9], %s433
          %s435 = sshll.u32 [#allocation10], 4
          %s436 = int_to_ptr.vmem [resolvable:$true] %s435
          %441 = dma.hbm_to_vmem [thread:$0]  %s2, 128, %s436, [#allocation9], 64, 64, 4
        $region20: #{tpu_custom_call.1} parent=11 // pred_fallthru
          _
        // Predicated region
        $region21: #{tpu_custom_call.1} parent=11 // pred_check
          %p442 = pneg %p163
        $region22: #{tpu_custom_call.1} parent=11 // pred_check_branch
          %444 = sbr.rel (%p442) target = $region24
        $region23: #{tpu_custom_call.1} parent=11 // pred_region
          %s446 = ssub.s32 1024, 1024
          %447 = vsyncadd [#allocation12], %s446
          %s448 = sshll.u32 [#allocation13], 4
          %s449 = int_to_ptr.vmem [resolvable:$true] %s448
          %454 = dma.hbm_to_vmem [thread:$0]  %s4, 1024, %s449, [#allocation12], 64, 64, 4
        $region24: #{tpu_custom_call.1} parent=11 // pred_fallthru
          _
        // Predicated region
        $region25: #{tpu_custom_call.1} parent=11 // pred_check
          %p455 = pneg %p184
        $region26: #{tpu_custom_call.1} parent=11 // pred_check_branch
          %457 = sbr.rel (%p455) target = $region28
        $region27: #{tpu_custom_call.1} parent=11 // pred_region
          %s459 = ssub.s32 1024, 1024
          %460 = vsyncadd [#allocation15], %s459
          %s461 = sshll.u32 [#allocation14], 4
          %s462 = int_to_ptr.vmem [resolvable:$true] %s461
          %467 = dma.hbm_to_vmem [thread:$0]  %s5, 1024, %s462, [#allocation15], 64, 64, 4
        $region28: #{tpu_custom_call.1} parent=11 // pred_fallthru
          _
        // Predicated region
        $region29: #{tpu_custom_call.1} parent=11 // pred_check
          %p468 = pneg %p205
        $region30: #{tpu_custom_call.1} parent=11 // pred_check_branch
          %470 = sbr.rel (%p468) target = $region32
        $region31: #{tpu_custom_call.1} parent=11 // pred_region
          %s472 = ssub.s32 16, 16
          %473 = vsyncadd [#allocation15], %s472
          %s475 = sshll.u32 [#allocation16], 4
          %s476 = int_to_ptr.vmem [resolvable:$true] %s475
          %478 = dma.hbm_to_vmem [thread:$0]  %s6, 16, %s476, [#allocation15]
        $region32: #{tpu_custom_call.1} parent=11 // pred_fallthru
          _
        // Predicated region
        $region33: #{tpu_custom_call.1} parent=11 // pred_check
          %p479 = pneg %p226
        $region34: #{tpu_custom_call.1} parent=11 // pred_check_branch
          %481 = sbr.rel (%p479) target = $region36
        $region35: #{tpu_custom_call.1} parent=11 // pred_region
          %s483 = ssub.s32 16, 16
          %484 = vsyncadd [#allocation18], %s483
          %s486 = sshll.u32 [#allocation17], 4
          %s487 = int_to_ptr.vmem [resolvable:$true] %s486
          %489 = dma.hbm_to_vmem [thread:$0]  %s7, 16, %s487, [#allocation18]
        $region36: #{tpu_custom_call.1} parent=11 // pred_fallthru
          _
        // Predicated region
        $region37: #{tpu_custom_call.1} parent=11 // pred_check
          %p490 = pneg %p247
        $region38: #{tpu_custom_call.1} parent=11 // pred_check_branch
          %492 = sbr.rel (%p490) target = $region40
        $region39: #{tpu_custom_call.1} parent=11 // pred_region
          %s494 = ssub.s32 512, 512
          %495 = vsyncadd [#allocation18], %s494
          %s496 = sshll.u32 [#allocation19], 4
          %s497 = int_to_ptr.vmem [resolvable:$true] %s496
          %502 = dma.hbm_to_vmem [thread:$0]  %s8, 512, %s497, [#allocation18], 64, 64, 4
        $region40: #{tpu_custom_call.1} parent=11 // pred_fallthru
          _
        // Predicated region
        $region41: #{tpu_custom_call.1} parent=11 // pred_check
          %p503 = pneg %p268
        $region42: #{tpu_custom_call.1} parent=11 // pred_check_branch
          %505 = sbr.rel (%p503) target = $region44
        $region43: #{tpu_custom_call.1} parent=11 // pred_region
          %s507 = ssub.s32 512, 512
          %508 = vsyncadd [#allocation21], %s507
          %s509 = sshll.u32 [#allocation20], 4
          %s510 = int_to_ptr.vmem [resolvable:$true] %s509
          %515 = dma.hbm_to_vmem [thread:$0]  %s9, 512, %s510, [#allocation21], 64, 64, 4
        $region44: #{tpu_custom_call.1} parent=11 // pred_fallthru
          _
        // Predicated region
        $region45: #{tpu_custom_call.1} parent=11 // pred_check
          %p516 = pneg %p289
        $region46: #{tpu_custom_call.1} parent=11 // pred_check_branch
          %518 = sbr.rel (%p516) target = $region48
        $region47: #{tpu_custom_call.1} parent=11 // pred_region
          %s520 = ssub.s32 512, 512
          %521 = vsyncadd [#allocation21], %s520
          %s522 = sshll.u32 [#allocation22], 4
          %s523 = int_to_ptr.vmem [resolvable:$true] %s522
          %528 = dma.hbm_to_vmem [thread:$0]  %s10, 512, %s523, [#allocation21], 64, 64, 4
        $region48: #{tpu_custom_call.1} parent=11 // pred_fallthru
          _
        // Predicated region
        $region49: #{tpu_custom_call.1} parent=11 // pred_check
          %p529 = pneg %p310
        $region50: #{tpu_custom_call.1} parent=11 // pred_check_branch
          %531 = sbr.rel (%p529) target = $region52
        $region51: #{tpu_custom_call.1} parent=11 // pred_region
          %s533 = ssub.s32 512, 512
          %534 = vsyncadd [#allocation24], %s533
          %s535 = sshll.u32 [#allocation23], 4
          %s536 = int_to_ptr.vmem [resolvable:$true] %s535
          %541 = dma.hbm_to_vmem [thread:$0]  %s11, 512, %s536, [#allocation24], 64, 64, 4
        $region52: #{tpu_custom_call.1} parent=11 // pred_fallthru
          _
        // Predicated region
        $region53: #{tpu_custom_call.1} parent=11 // pred_check
          %p542 = pneg %p331
        $region54: #{tpu_custom_call.1} parent=11 // pred_check_branch
          %544 = sbr.rel (%p542) target = $region56
        $region55: #{tpu_custom_call.1} parent=11 // pred_region
          %s546 = ssub.s32 512, 512
          %547 = vsyncadd [#allocation24], %s546
          %s548 = sshll.u32 [#allocation25], 4
          %s549 = int_to_ptr.vmem [resolvable:$true] %s548
          %554 = dma.hbm_to_vmem [thread:$0]  %s12, 512, %s549, [#allocation24], 64, 64, 4
        $region56: #{tpu_custom_call.1} parent=11 // pred_fallthru
          _
        // Predicated region
        $region57: #{tpu_custom_call.1} parent=11 // pred_check
          %p555 = pneg %p352
        $region58: #{tpu_custom_call.1} parent=11 // pred_check_branch
          %557 = sbr.rel (%p555) target = $region60
        $region59: #{tpu_custom_call.1} parent=11 // pred_region
          %s559 = ssub.s32 1024, 1024
          %560 = vsyncadd [#allocation27], %s559
          %s561 = sshll.u32 [#allocation26], 4
          %s562 = int_to_ptr.vmem [resolvable:$true] %s561
          %567 = dma.hbm_to_vmem [thread:$0]  %s13, 1024, %s562, [#allocation27], 64, 64, 4
        $region60: #{tpu_custom_call.1} parent=11 // pred_fallthru
          _
        // Predicated region
        $region61: #{tpu_custom_call.1} parent=11 // pred_check
          %p568 = pneg %p373
        $region62: #{tpu_custom_call.1} parent=11 // pred_check_branch
          %570 = sbr.rel (%p568) target = $region64
        $region63: #{tpu_custom_call.1} parent=11 // pred_region
          %s572 = ssub.s32 512, 512
          %573 = vsyncadd [#allocation27], %s572
          %s574 = sshll.u32 [#allocation28], 4
          %s575 = int_to_ptr.vmem [resolvable:$true] %s574
          %580 = dma.hbm_to_vmem [thread:$0]  %s14, 512, %s575, [#allocation27], 64, 64, 4
        $region64: #{tpu_custom_call.1} parent=11 // pred_fallthru
          _
      $region12: #{tpu_custom_call.1} parent=5 // pred_fallthru
        _
      %p581 = scmp.lt.s32.totalorder %s36, 2
      // Predicated region
      $region65: #{tpu_custom_call.1} parent=5 // pred_check
        %p582 = pneg %p581
      $region66: #{tpu_custom_call.1} parent=5 // pred_check_branch
        %584 = sbr.rel (%p582) target = $region68
      $region67: #{tpu_custom_call.1} parent=5 // pred_region
        // Predicated region
        $region69: #{tpu_custom_call.1} parent=67 // pred_check
          %p585 = pneg %p68
        $region70: #{tpu_custom_call.1} parent=67 // pred_check_branch
          %587 = sbr.rel (%p585) target = $region72
        $region71: #{tpu_custom_call.1} parent=67 // pred_region
          %s588 = sand.u32 %s58, 1
          %s589 = scalar_lea.sflag [#allocation6], %s588
          %s590 = sand.u32 %s58, 1
          %s591 = smul.addr %s590, 8
          %s592 = scalar_lea.vmem [#allocation5], %s591
          %s594 = ssub.s32 128, 128
          %595 = vsyncadd %s589, %s594
          %s596 = smul.addr %s43, 2
          %s597 = smul.addr %s596, 64
          %s598 = scalar_lea.hbm %s0, %s597
          %s599 = sshll.u32 %s592, 4
          %s600 = int_to_ptr.vmem [resolvable:$true] %s599
          %605 = dma.hbm_to_vmem [thread:$0]  %s598, 128, %s600, %s589, 64, 64, 4
        $region72: #{tpu_custom_call.1} parent=67 // pred_fallthru
          _
        // Predicated region
        $region73: #{tpu_custom_call.1} parent=67 // pred_check
          %p606 = pneg %p136
        $region74: #{tpu_custom_call.1} parent=67 // pred_check_branch
          %608 = sbr.rel (%p606) target = $region76
        $region75: #{tpu_custom_call.1} parent=67 // pred_region
          %s609 = sand.u32 %s36, 1
          %s610 = scalar_lea.sflag [#allocation12], %s609
          %s611 = sand.u32 %s126, 1
          %s612 = scalar_lea.vmem [#allocation11], %s611
          %s614 = ssub.s32 16, 16
          %615 = vsyncadd %s610, %s614
          %s616 = smul.addr %s43, 16
          %s617 = scalar_lea.hbm %s3, %s616
          %s619 = sshll.u32 %s612, 4
          %s620 = int_to_ptr.vmem [resolvable:$true] %s619
          %622 = dma.hbm_to_vmem [thread:$0]  %s617, 16, %s620, %s610
        $region76: #{tpu_custom_call.1} parent=67 // pred_fallthru
          _
      $region68: #{tpu_custom_call.1} parent=5 // pred_fallthru
        _
      %p623 = scmp.le.s32.totalorder 1, %s36
      %p624 = scmp.lt.s32.totalorder %s36, 3
      %p625 = pnand %p623, %p624
      %p626 = pneg %p625
      // Predicated region
      $region77: #{tpu_custom_call.1} parent=5 // pred_check
        _
      $region78: #{tpu_custom_call.1} parent=5 // pred_check_branch
        %628 = sbr.rel (%p625) target = $region80
      $region79: #{tpu_custom_call.1} parent=5 // pred_region
        %s629 = ssub.s32 %s36, 1
        %s630 = sand.u32 %s61, 1
        %s631 = scalar_lea.sflag [#allocation6], %s630
        %s632 = sand.u32 %s61, 1
        %s633 = smul.addr %s632, 8
        %s634 = scalar_lea.vmem [#allocation5], %s633
        // Predicated region
        $region81: #{tpu_custom_call.1} parent=79 // pred_check
          %p635 = pneg %p74
        $region82: #{tpu_custom_call.1} parent=79 // pred_check_branch
          %637 = sbr.rel (%p635) target = $region84
        $region83: #{tpu_custom_call.1} parent=79 // pred_region
          %638 = dma.done %s631, 128
        $region84: #{tpu_custom_call.1} parent=79 // pred_fallthru
          _
        // Predicated region
        $region85: #{tpu_custom_call.1} parent=79 // pred_check
          %p639 = pneg %p95
        $region86: #{tpu_custom_call.1} parent=79 // pred_check_branch
          %641 = sbr.rel (%p639) target = $region88
        $region87: #{tpu_custom_call.1} parent=79 // pred_region
          %642 = dma.done [#allocation9], 128
        $region88: #{tpu_custom_call.1} parent=79 // pred_fallthru
          _
        // Predicated region
        $region89: #{tpu_custom_call.1} parent=79 // pred_check
          %p643 = pneg %p116
        $region90: #{tpu_custom_call.1} parent=79 // pred_check_branch
          %645 = sbr.rel (%p643) target = $region92
        $region91: #{tpu_custom_call.1} parent=79 // pred_region
          %646 = dma.done [#allocation9], 128
        $region92: #{tpu_custom_call.1} parent=79 // pred_fallthru
          _
        %s647 = sand.u32 %s41, 1
        %s648 = scalar_lea.sflag [#allocation12], %s647
        %s649 = sand.u32 %s129, 1
        %s650 = scalar_lea.vmem [#allocation11], %s649
        // Predicated region
        $region93: #{tpu_custom_call.1} parent=79 // pred_check
          %p651 = pneg %p142
        $region94: #{tpu_custom_call.1} parent=79 // pred_check_branch
          %653 = sbr.rel (%p651) target = $region96
        $region95: #{tpu_custom_call.1} parent=79 // pred_region
          %654 = dma.done %s648, 16
        $region96: #{tpu_custom_call.1} parent=79 // pred_fallthru
          _
        // Predicated region
        $region97: #{tpu_custom_call.1} parent=79 // pred_check
          %p655 = pneg %p163
        $region98: #{tpu_custom_call.1} parent=79 // pred_check_branch
          %657 = sbr.rel (%p655) target = $region100
        $region99: #{tpu_custom_call.1} parent=79 // pred_region
          %658 = dma.done [#allocation12], 1024
        $region100: #{tpu_custom_call.1} parent=79 // pred_fallthru
          _
        // Predicated region
        $region101: #{tpu_custom_call.1} parent=79 // pred_check
          %p659 = pneg %p184
        $region102: #{tpu_custom_call.1} parent=79 // pred_check_branch
          %661 = sbr.rel (%p659) target = $region104
        $region103: #{tpu_custom_call.1} parent=79 // pred_region
          %662 = dma.done [#allocation15], 1024
        $region104: #{tpu_custom_call.1} parent=79 // pred_fallthru
          _
        // Predicated region
        $region105: #{tpu_custom_call.1} parent=79 // pred_check
          %p663 = pneg %p205
        $region106: #{tpu_custom_call.1} parent=79 // pred_check_branch
          %665 = sbr.rel (%p663) target = $region108
        $region107: #{tpu_custom_call.1} parent=79 // pred_region
          %666 = dma.done [#allocation15], 16
        $region108: #{tpu_custom_call.1} parent=79 // pred_fallthru
          _
        // Predicated region
        $region109: #{tpu_custom_call.1} parent=79 // pred_check
          %p667 = pneg %p226
        $region110: #{tpu_custom_call.1} parent=79 // pred_check_branch
          %669 = sbr.rel (%p667) target = $region112
        $region111: #{tpu_custom_call.1} parent=79 // pred_region
          %670 = dma.done [#allocation18], 16
        $region112: #{tpu_custom_call.1} parent=79 // pred_fallthru
          _
        // Predicated region
        $region113: #{tpu_custom_call.1} parent=79 // pred_check
          %p671 = pneg %p247
        $region114: #{tpu_custom_call.1} parent=79 // pred_check_branch
          %673 = sbr.rel (%p671) target = $region116
        $region115: #{tpu_custom_call.1} parent=79 // pred_region
          %674 = dma.done [#allocation18], 512
        $region116: #{tpu_custom_call.1} parent=79 // pred_fallthru
          _
        // Predicated region
        $region117: #{tpu_custom_call.1} parent=79 // pred_check
          %p675 = pneg %p268
        $region118: #{tpu_custom_call.1} parent=79 // pred_check_branch
          %677 = sbr.rel (%p675) target = $region120
        $region119: #{tpu_custom_call.1} parent=79 // pred_region
          %678 = dma.done [#allocation21], 512
        $region120: #{tpu_custom_call.1} parent=79 // pred_fallthru
          _
        // Predicated region
        $region121: #{tpu_custom_call.1} parent=79 // pred_check
          %p679 = pneg %p289
        $region122: #{tpu_custom_call.1} parent=79 // pred_check_branch
          %681 = sbr.rel (%p679) target = $region124
        $region123: #{tpu_custom_call.1} parent=79 // pred_region
          %682 = dma.done [#allocation21], 512
        $region124: #{tpu_custom_call.1} parent=79 // pred_fallthru
          _
        // Predicated region
        $region125: #{tpu_custom_call.1} parent=79 // pred_check
          %p683 = pneg %p310
        $region126: #{tpu_custom_call.1} parent=79 // pred_check_branch
          %685 = sbr.rel (%p683) target = $region128
        $region127: #{tpu_custom_call.1} parent=79 // pred_region
          %686 = dma.done [#allocation24], 512
        $region128: #{tpu_custom_call.1} parent=79 // pred_fallthru
          _
        // Predicated region
        $region129: #{tpu_custom_call.1} parent=79 // pred_check
          %p687 = pneg %p331
        $region130: #{tpu_custom_call.1} parent=79 // pred_check_branch
          %689 = sbr.rel (%p687) target = $region132
        $region131: #{tpu_custom_call.1} parent=79 // pred_region
          %690 = dma.done [#allocation24], 512
        $region132: #{tpu_custom_call.1} parent=79 // pred_fallthru
          _
        // Predicated region
        $region133: #{tpu_custom_call.1} parent=79 // pred_check
          %p691 = pneg %p352
        $region134: #{tpu_custom_call.1} parent=79 // pred_check_branch
          %693 = sbr.rel (%p691) target = $region136
        $region135: #{tpu_custom_call.1} parent=79 // pred_region
          %694 = dma.done [#allocation27], 1024
        $region136: #{tpu_custom_call.1} parent=79 // pred_fallthru
          _
        // Predicated region
        $region137: #{tpu_custom_call.1} parent=79 // pred_check
          %p695 = pneg %p373
        $region138: #{tpu_custom_call.1} parent=79 // pred_check_branch
          %697 = sbr.rel (%p695) target = $region140
        $region139: #{tpu_custom_call.1} parent=79 // pred_region
          %698 = dma.done [#allocation27], 512
        $region140: #{tpu_custom_call.1} parent=79 // pred_fallthru
          _
        %s699 = sand.u32 %s61, 1
        %s700 = scalar_lea.sflag [#allocation6], %s699
        %s701 = sand.u32 %s61, 1
        %s702 = smul.addr %s701, 8
        %s703 = scalar_lea.vmem [#allocation5], %s702
        %p704 = pneg %p74
        %p705 = pneg %p71
        %p706 = pneg %p95
        %p707 = pneg %p92
        %p708 = pneg %p116
        %p709 = pneg %p113
        %s710 = sand.u32 %s41, 1
        %s711 = scalar_lea.sflag [#allocation12], %s710
        %s712 = sand.u32 %s129, 1
        %s713 = scalar_lea.vmem [#allocation11], %s712
        %p714 = pneg %p142
        %p715 = pneg %p139
        %p716 = pneg %p163
        %p717 = pneg %p160
        %p718 = pneg %p184
        %p719 = pneg %p181
        %p720 = pneg %p205
        %p721 = pneg %p202
        %p722 = pneg %p226
        %p723 = pneg %p223
        %p724 = pneg %p247
        %p725 = pneg %p244
        %p726 = pneg %p268
        %p727 = pneg %p265
        %p728 = pneg %p289
        %p729 = pneg %p286
        %p730 = pneg %p310
        %p731 = pneg %p307
        %p732 = pneg %p331
        %p733 = pneg %p328
        %p734 = pneg %p352
        %p735 = pneg %p349
        %p736 = pneg %p373
        %p737 = pneg %p370
        %p738 = pneg %p401
        %p739 = pneg %p398
        %s740 = sand.u32 %s388, 1
        %s741 = scalar_lea.sflag [#allocation7], %s740
        %s742 = sand.u32 %s388, 1
        %s743 = smul.addr %s742, 16
        %s744 = scalar_lea.vmem [#allocation29], %s743
        %s745 = smul.u32 2, %s46
        %p747 = scmp.eq.s32.totalorder %s46, 0
        // Predicated region
        $region141: #{tpu_custom_call.1} parent=79 // pred_check
          %p748 = pneg %p747
        $region142: #{tpu_custom_call.1} parent=79 // pred_check_branch
          %750 = sbr.rel (%p748) target = $region144
        $region143: #{tpu_custom_call.1} parent=79 // pred_region
          %v751 = vld [vmem:[%s634] sm:$0xf]
          %v752 = vld [vmem:[%s634 + $0x4] sm:$0xf]
          %v753 = vld [vmem:[#allocation13] sm:$0xf]
          %v754 = vld [vmem:[#allocation13 + $0x4] sm:$0xf]
          %v755 = vld [vmem:[#allocation13 + $0x8] sm:$0xf]
          %v756 = vld [vmem:[#allocation13 + $0xc] sm:$0xf]
          %v757 = vld [vmem:[#allocation13 + $0x10] sm:$0xf]
          %v758 = vld [vmem:[#allocation13 + $0x14] sm:$0xf]
          %v759 = vld [vmem:[#allocation13 + $0x18] sm:$0xf]
          %v760 = vld [vmem:[#allocation13 + $0x1c] sm:$0xf]
          %v761 = vld [vmem:[#allocation13 + $0x20] sm:$0xf]
          %v762 = vld [vmem:[#allocation13 + $0x24] sm:$0xf]
          %v763 = vld [vmem:[#allocation13 + $0x28] sm:$0xf]
          %v764 = vld [vmem:[#allocation13 + $0x2c] sm:$0xf]
          %v765 = vld [vmem:[#allocation13 + $0x30] sm:$0xf]
          %v766 = vld [vmem:[#allocation13 + $0x34] sm:$0xf]
          %v767 = vld [vmem:[#allocation13 + $0x38] sm:$0xf]
          %v768 = vld [vmem:[#allocation13 + $0x3c] sm:$0xf]
          %v771 = vunpack.c.l.b16 %v751
          %v772 = vunpack.c.l.b16 %v752
          %v773 = vpack.c.b16 %v772, %v771
          %v791 = vunpack.c.l.b16 %v753
          %v792 = vunpack.c.l.b16 %v754
          %v793 = vunpack.c.l.b16 %v755
          %v794 = vunpack.c.l.b16 %v756
          %v795 = vunpack.c.l.b16 %v757
          %v796 = vunpack.c.l.b16 %v758
          %v797 = vunpack.c.l.b16 %v759
          %v798 = vunpack.c.l.b16 %v760
          %v799 = vunpack.c.l.b16 %v761
          %v800 = vunpack.c.l.b16 %v762
          %v801 = vunpack.c.l.b16 %v763
          %v802 = vunpack.c.l.b16 %v764
          %v803 = vunpack.c.l.b16 %v765
          %v804 = vunpack.c.l.b16 %v766
          %v805 = vunpack.c.l.b16 %v767
          %v806 = vunpack.c.l.b16 %v768
          %v807 = vpack.c.b16 %v792, %v791
          %v808 = vpack.c.b16 %v794, %v793
          %v809 = vpack.c.b16 %v796, %v795
          %v810 = vpack.c.b16 %v798, %v797
          %v811 = vpack.c.b16 %v800, %v799
          %v812 = vpack.c.b16 %v802, %v801
          %v813 = vpack.c.b16 %v804, %v803
          %v814 = vpack.c.b16 %v806, %v805
          %823 = vmatprep.subr.bf16.mxu0 0
          %824 = vmatpush1.bf16.msra.mxu0 %v807
          %825 = vmatprep.subr.bf16.mxu0 0
          %826 = vmatpush1.bf16.msra.mxu0 %v808
          %827 = vmatprep.subr.bf16.mxu0 0
          %828 = vmatpush1.bf16.msra.mxu0 %v809
          %829 = vmatprep.subr.bf16.mxu0 0
          %830 = vmatpush1.bf16.msra.mxu0 %v810
          %831 = vmatprep.subr.bf16.mxu0 0
          %832 = vmatpush1.bf16.msra.mxu0 %v811
          %833 = vmatprep.subr.bf16.mxu0 0
          %834 = vmatpush1.bf16.msra.mxu0 %v812
          %835 = vmatprep.subr.bf16.mxu0 0
          %836 = vmatpush1.bf16.msra.mxu0 %v813
          %837 = vmatprep.subr.bf16.mxu0 0
          %838 = vmatpush1.bf16.msra.mxu0 %v814
          %839 = vmatprep.subr.bf16.mxu0 0
          %840 = vmatpush1.bf16.msra.mxu0 0
          %841 = vmatprep.subr.bf16.mxu0 0
          %842 = vmatpush1.bf16.msra.mxu0 0
          %843 = vmatprep.subr.bf16.mxu0 0
          %844 = vmatpush1.bf16.msra.mxu0 0
          %845 = vmatprep.subr.bf16.mxu0 0
          %846 = vmatpush1.bf16.msra.mxu0 0
          %847 = vmatprep.subr.bf16.mxu0 0
          %848 = vmatpush1.bf16.msra.mxu0 0
          %849 = vmatprep.subr.bf16.mxu0 0
          %850 = vmatpush1.bf16.msra.mxu0 0
          %851 = vmatprep.subr.bf16.mxu0 0
          %852 = vmatpush1.bf16.msra.mxu0 0
          %853 = vmatprep.subr.bf16.mxu0 0
          %854 = vmatpush1.bf16.msra.mxu0 0
          %855 = vmatprep.mubr.bf16.mxu0 0
          %856 = vmatmul.mubr.bf16.gmra.mrb[0].mxu0 %v773
          %v857 = vpop.f32.mrb[0].mxu0
          %v858 = vadd.f32 0.0, %v857
          %v859 = vpop.f32.mrb[0].mxu0
          %v860 = vpop.f32.mrb[0].mxu0
          %v861 = vadd.f32 0.0, %v860
          %v862 = vpop.f32.mrb[0].mxu0
          %863 = vdwg.mxu0
          %v864 = vld [vmem:[#allocation14] sm:$0xf]
          %v865 = vld [vmem:[#allocation14 + $0x4] sm:$0xf]
          %v866 = vld [vmem:[#allocation14 + $0x8] sm:$0xf]
          %v867 = vld [vmem:[#allocation14 + $0xc] sm:$0xf]
          %v868 = vld [vmem:[#allocation14 + $0x10] sm:$0xf]
          %v869 = vld [vmem:[#allocation14 + $0x14] sm:$0xf]
          %v870 = vld [vmem:[#allocation14 + $0x18] sm:$0xf]
          %v871 = vld [vmem:[#allocation14 + $0x1c] sm:$0xf]
          %v872 = vld [vmem:[#allocation14 + $0x20] sm:$0xf]
          %v873 = vld [vmem:[#allocation14 + $0x24] sm:$0xf]
          %v874 = vld [vmem:[#allocation14 + $0x28] sm:$0xf]
          %v875 = vld [vmem:[#allocation14 + $0x2c] sm:$0xf]
          %v876 = vld [vmem:[#allocation14 + $0x30] sm:$0xf]
          %v877 = vld [vmem:[#allocation14 + $0x34] sm:$0xf]
          %v878 = vld [vmem:[#allocation14 + $0x38] sm:$0xf]
          %v879 = vld [vmem:[#allocation14 + $0x3c] sm:$0xf]
          %v896 = vunpack.c.l.b16 %v864
          %v897 = vunpack.c.l.b16 %v865
          %v898 = vunpack.c.l.b16 %v866
          %v899 = vunpack.c.l.b16 %v867
          %v900 = vunpack.c.l.b16 %v868
          %v901 = vunpack.c.l.b16 %v869
          %v902 = vunpack.c.l.b16 %v870
          %v903 = vunpack.c.l.b16 %v871
          %v904 = vunpack.c.l.b16 %v872
          %v905 = vunpack.c.l.b16 %v873
          %v906 = vunpack.c.l.b16 %v874
          %v907 = vunpack.c.l.b16 %v875
          %v908 = vunpack.c.l.b16 %v876
          %v909 = vunpack.c.l.b16 %v877
          %v910 = vunpack.c.l.b16 %v878
          %v911 = vunpack.c.l.b16 %v879
          %v912 = vpack.c.b16 %v897, %v896
          %v913 = vpack.c.b16 %v899, %v898
          %v914 = vpack.c.b16 %v901, %v900
          %v915 = vpack.c.b16 %v903, %v902
          %v916 = vpack.c.b16 %v905, %v904
          %v917 = vpack.c.b16 %v907, %v906
          %v918 = vpack.c.b16 %v909, %v908
          %v919 = vpack.c.b16 %v911, %v910
          %928 = vmatprep.subr.bf16.mxu0 0
          %929 = vmatpush1.bf16.msra.mxu0 %v912
          %930 = vmatprep.subr.bf16.mxu0 0
          %931 = vmatpush1.bf16.msra.mxu0 %v913
          %932 = vmatprep.subr.bf16.mxu0 0
          %933 = vmatpush1.bf16.msra.mxu0 %v914
          %934 = vmatprep.subr.bf16.mxu0 0
          %935 = vmatpush1.bf16.msra.mxu0 %v915
          %936 = vmatprep.subr.bf16.mxu0 0
          %937 = vmatpush1.bf16.msra.mxu0 %v916
          %938 = vmatprep.subr.bf16.mxu0 0
          %939 = vmatpush1.bf16.msra.mxu0 %v917
          %940 = vmatprep.subr.bf16.mxu0 0
          %941 = vmatpush1.bf16.msra.mxu0 %v918
          %942 = vmatprep.subr.bf16.mxu0 0
          %943 = vmatpush1.bf16.msra.mxu0 %v919
          %944 = vmatprep.subr.bf16.mxu0 0
          %945 = vmatpush1.bf16.msra.mxu0 0
          %946 = vmatprep.subr.bf16.mxu0 0
          %947 = vmatpush1.bf16.msra.mxu0 0
          %948 = vmatprep.subr.bf16.mxu0 0
          %949 = vmatpush1.bf16.msra.mxu0 0
          %950 = vmatprep.subr.bf16.mxu0 0
          %951 = vmatpush1.bf16.msra.mxu0 0
          %952 = vmatprep.subr.bf16.mxu0 0
          %953 = vmatpush1.bf16.msra.mxu0 0
          %954 = vmatprep.subr.bf16.mxu0 0
          %955 = vmatpush1.bf16.msra.mxu0 0
          %956 = vmatprep.subr.bf16.mxu0 0
          %957 = vmatpush1.bf16.msra.mxu0 0
          %958 = vmatprep.subr.bf16.mxu0 0
          %959 = vmatpush1.bf16.msra.mxu0 0
          %960 = vmatprep.mubr.bf16.mxu0 0
          %961 = vmatmul.mubr.bf16.gmra.mrb[0].mxu0 %v773
          %v962 = vpop.f32.mrb[0].mxu0
          %v963 = vadd.f32 0.0, %v962
          %v964 = vpop.f32.mrb[0].mxu0
          %v965 = vpop.f32.mrb[0].mxu0
          %v966 = vadd.f32 0.0, %v965
          %v967 = vpop.f32.mrb[0].mxu0
          %968 = vdwg.mxu0
          %v969 = vmul.f32 %v858, %v858
          %v970 = vmul.f32 %v861, %v861
          %vm971 = vcmask 523264
          %v972 = vsel %vm971, %v969, 0.0
          %973 = vadd.xlane.f32.xlu0 %v972
          %v974 = vpop.xlane.xlu0 %973
          %v975 = vsel %vm971, %v970, 0.0
          %976 = vadd.xlane.f32.xlu0 %v975
          %v977 = vpop.xlane.xlu0 %976
          %v978 = vmul.f32 %v963, %v963
          %v979 = vmul.f32 %v966, %v966
          %v980 = vsel %vm971, %v978, 0.0
          %981 = vadd.xlane.f32.xlu0 %v980
          %v982 = vpop.xlane.xlu0 %981
          %v983 = vsel %vm971, %v979, 0.0
          %984 = vadd.xlane.f32.xlu0 %v983
          %v985 = vpop.xlane.xlu0 %984
          %v986 = vadd.f32 %v974, %v982
          %v987 = vadd.f32 %v977, %v985
          %v988 = vmul.f32 %v986, 0.0078125
          %v989 = vmul.f32 %v987, 0.0078125
          %v990 = vadd.f32 %v988, 1e-06
          %v991 = vadd.f32 %v989, 1e-06
          %v992 = vrsqrt.pop %v990
          %v993 = vrsqrt.pop %v991
          %v994 = vmul.f32 %v858, %v992
          %v995 = vmul.f32 %v861, %v993
          %v996 = vld [vmem:[#allocation16] sm:$0x1]
          %v998 = vlaneseq
          %v999 = vshrl.u32 %v998, 7
          %v1000 = vsub.s32 0, %v999
          %v1001 = vrot.slane %v996, %v1000
          %v1003 = vmul.f32 %v994, %v1001
          %v1004 = vmul.f32 %v995, %v1001
          %v1005 = vpack.c.bf16 %v1004, %v1003
          %1006 = vst.msk [vmem:[#allocation2] sm:$0xff] %vm971, %v1005
          %v1007 = vmul.f32 %v963, %v992
          %v1008 = vmul.f32 %v966, %v993
          %v1009 = vld [vmem:[#allocation17] sm:$0x1]
          %v1011 = vlaneseq
          %v1012 = vshrl.u32 %v1011, 7
          %v1013 = vsub.s32 0, %v1012
          %v1014 = vrot.slane %v1009, %v1013
          %v1016 = vmul.f32 %v1007, %v1014
          %v1017 = vmul.f32 %v1008, %v1014
          %v1018 = vpack.c.bf16 %v1017, %v1016
          %v1019 = vld [vmem:[#allocation8] sm:$0xf]
          %v1020 = vld [vmem:[#allocation8 + $0x4] sm:$0xf]
          %v1021 = vld [vmem:[#allocation10] sm:$0xf]
          %v1022 = vld [vmem:[#allocation10 + $0x4] sm:$0xf]
          %v1023 = vld [vmem:[#allocation22] sm:$0xf]
          %v1024 = vld [vmem:[#allocation22 + $0x4] sm:$0xf]
          %v1025 = vld [vmem:[#allocation22 + $0x8] sm:$0xf]
          %v1026 = vld [vmem:[#allocation22 + $0xc] sm:$0xf]
          %v1027 = vld [vmem:[#allocation22 + $0x10] sm:$0xf]
          %v1028 = vld [vmem:[#allocation22 + $0x14] sm:$0xf]
          %v1029 = vld [vmem:[#allocation22 + $0x18] sm:$0xf]
          %v1030 = vld [vmem:[#allocation22 + $0x1c] sm:$0xf]
          %v1039 = vunpack.c.l.b16 %v1023
          %v1040 = vunpack.c.l.b16 %v1024
          %v1041 = vunpack.c.l.b16 %v1025
          %v1042 = vunpack.c.l.b16 %v1026
          %v1043 = vunpack.c.l.b16 %v1027
          %v1044 = vunpack.c.l.b16 %v1028
          %v1045 = vunpack.c.l.b16 %v1029
          %v1046 = vunpack.c.l.b16 %v1030
          %v1047 = vpack.c.b16 %v1040, %v1039
          %v1048 = vpack.c.b16 %v1042, %v1041
          %v1049 = vpack.c.b16 %v1044, %v1043
          %v1050 = vpack.c.b16 %v1046, %v1045
          %v1056 = vsel %vm971, %v1018, 0
          %1058 = vmatprep.subr.bf16.mxu0 0
          %1059 = vmatpush1.bf16.msra.mxu0 %v1047
          %1060 = vmatprep.subr.bf16.mxu0 0
          %1061 = vmatpush1.bf16.msra.mxu0 %v1048
          %1062 = vmatprep.subr.bf16.mxu0 0
          %1063 = vmatpush1.bf16.msra.mxu0 %v1049
          %1064 = vmatprep.subr.bf16.mxu0 0
          %1065 = vmatpush1.bf16.msra.mxu0 %v1050
          %1066 = vmatprep.subr.bf16.mxu0 0
          %1067 = vmatpush1.bf16.msra.mxu0 0
          %1068 = vmatprep.subr.bf16.mxu0 0
          %1069 = vmatpush1.bf16.msra.mxu0 0
          %1070 = vmatprep.subr.bf16.mxu0 0
          %1071 = vmatpush1.bf16.msra.mxu0 0
          %1072 = vmatprep.subr.bf16.mxu0 0
          %1073 = vmatpush1.bf16.msra.mxu0 0
          %1074 = vmatprep.subr.bf16.mxu0 0
          %1075 = vmatpush1.bf16.msra.mxu0 0
          %1076 = vmatprep.subr.bf16.mxu0 0
          %1077 = vmatpush1.bf16.msra.mxu0 0
          %1078 = vmatprep.subr.bf16.mxu0 0
          %1079 = vmatpush1.bf16.msra.mxu0 0
          %1080 = vmatprep.subr.bf16.mxu0 0
          %1081 = vmatpush1.bf16.msra.mxu0 0
          %1082 = vmatprep.subr.bf16.mxu0 0
          %1083 = vmatpush1.bf16.msra.mxu0 0
          %1084 = vmatprep.subr.bf16.mxu0 0
          %1085 = vmatpush1.bf16.msra.mxu0 0
          %1086 = vmatprep.subr.bf16.mxu0 0
          %1087 = vmatpush1.bf16.msra.mxu0 0
          %1088 = vmatprep.subr.bf16.mxu0 0
          %1089 = vmatpush1.bf16.msra.mxu0 0
          %1090 = vmatprep.mubr.bf16.mxu0 0
          %1091 = vmatmul.mubr.bf16.gmra.mrb[0].mxu0 %v1056
          %v1092 = vpop.f32.mrb[0].mxu0
          %v1093 = vadd.f32 0.0, %v1092
          %v1094 = vpop.f32.mrb[0].mxu0
          %v1095 = vpop.f32.mrb[0].mxu0
          %v1096 = vadd.f32 0.0, %v1095
          %v1097 = vpop.f32.mrb[0].mxu0
          %1098 = vdwg.mxu0
          %v1099 = vunpack.c.l.bf16 %v1019
          %v1100 = vunpack.c.l.bf16 %v1020
          %v1101 = vmul.f32 %v1093, %v1099
          %v1102 = vmul.f32 %v1096, %v1100
          %v1103 = vld [vmem:[#allocation23] sm:$0xf]
          %v1104 = vld [vmem:[#allocation23 + $0x4] sm:$0xf]
          %v1105 = vld [vmem:[#allocation23 + $0x8] sm:$0xf]
          %v1106 = vld [vmem:[#allocation23 + $0xc] sm:$0xf]
          %v1107 = vld [vmem:[#allocation23 + $0x10] sm:$0xf]
          %v1108 = vld [vmem:[#allocation23 + $0x14] sm:$0xf]
          %v1109 = vld [vmem:[#allocation23 + $0x18] sm:$0xf]
          %v1110 = vld [vmem:[#allocation23 + $0x1c] sm:$0xf]
          %v1119 = vunpack.c.l.b16 %v1103
          %v1120 = vunpack.c.l.b16 %v1104
          %v1121 = vunpack.c.l.b16 %v1105
          %v1122 = vunpack.c.l.b16 %v1106
          %v1123 = vunpack.c.l.b16 %v1107
          %v1124 = vunpack.c.l.b16 %v1108
          %v1125 = vunpack.c.l.b16 %v1109
          %v1126 = vunpack.c.l.b16 %v1110
          %v1127 = vpack.c.b16 %v1120, %v1119
          %v1128 = vpack.c.b16 %v1122, %v1121
          %v1129 = vpack.c.b16 %v1124, %v1123
          %v1130 = vpack.c.b16 %v1126, %v1125
          %1135 = vmatprep.subr.bf16.mxu0 0
          %1136 = vmatpush1.bf16.msra.mxu0 %v1127
          %1137 = vmatprep.subr.bf16.mxu0 0
          %1138 = vmatpush1.bf16.msra.mxu0 %v1128
          %1139 = vmatprep.subr.bf16.mxu0 0
          %1140 = vmatpush1.bf16.msra.mxu0 %v1129
          %1141 = vmatprep.subr.bf16.mxu0 0
          %1142 = vmatpush1.bf16.msra.mxu0 %v1130
          %1143 = vmatprep.subr.bf16.mxu0 0
          %1144 = vmatpush1.bf16.msra.mxu0 0
          %1145 = vmatprep.subr.bf16.mxu0 0
          %1146 = vmatpush1.bf16.msra.mxu0 0
          %1147 = vmatprep.subr.bf16.mxu0 0
          %1148 = vmatpush1.bf16.msra.mxu0 0
          %1149 = vmatprep.subr.bf16.mxu0 0
          %1150 = vmatpush1.bf16.msra.mxu0 0
          %1151 = vmatprep.subr.bf16.mxu0 0
          %1152 = vmatpush1.bf16.msra.mxu0 0
          %1153 = vmatprep.subr.bf16.mxu0 0
          %1154 = vmatpush1.bf16.msra.mxu0 0
          %1155 = vmatprep.subr.bf16.mxu0 0
          %1156 = vmatpush1.bf16.msra.mxu0 0
          %1157 = vmatprep.subr.bf16.mxu0 0
          %1158 = vmatpush1.bf16.msra.mxu0 0
          %1159 = vmatprep.subr.bf16.mxu0 0
          %1160 = vmatpush1.bf16.msra.mxu0 0
          %1161 = vmatprep.subr.bf16.mxu0 0
          %1162 = vmatpush1.bf16.msra.mxu0 0
          %1163 = vmatprep.subr.bf16.mxu0 0
          %1164 = vmatpush1.bf16.msra.mxu0 0
          %1165 = vmatprep.subr.bf16.mxu0 0
          %1166 = vmatpush1.bf16.msra.mxu0 0
          %1167 = vmatprep.mubr.bf16.mxu0 0
          %1168 = vmatmul.mubr.bf16.gmra.mrb[0].mxu0 %v1056
          %v1169 = vpop.f32.mrb[0].mxu0
          %v1170 = vadd.f32 0.0, %v1169
          %v1171 = vpop.f32.mrb[0].mxu0
          %v1172 = vpop.f32.mrb[0].mxu0
          %v1173 = vadd.f32 0.0, %v1172
          %v1174 = vpop.f32.mrb[0].mxu0
          %1175 = vdwg.mxu0
          %v1176 = vunpack.c.l.bf16 %v1021
          %v1177 = vunpack.c.l.bf16 %v1022
          %v1178 = vmul.f32 %v1170, %v1176
          %v1179 = vmul.f32 %v1173, %v1177
          %v1180 = vadd.f32 %v1101, %v1178
          %v1181 = vadd.f32 %v1102, %v1179
          %v1182 = vpack.c.bf16 %v1181, %v1180
          %v1183 = vld [vmem:[#allocation25] sm:$0xf]
          %v1184 = vld [vmem:[#allocation25 + $0x4] sm:$0xf]
          %v1185 = vld [vmem:[#allocation25 + $0x8] sm:$0xf]
          %v1186 = vld [vmem:[#allocation25 + $0xc] sm:$0xf]
          %v1187 = vld [vmem:[#allocation25 + $0x10] sm:$0xf]
          %v1188 = vld [vmem:[#allocation25 + $0x14] sm:$0xf]
          %v1189 = vld [vmem:[#allocation25 + $0x18] sm:$0xf]
          %v1190 = vld [vmem:[#allocation25 + $0x1c] sm:$0xf]
          %v1199 = vunpack.c.l.b16 %v1183
          %v1200 = vunpack.c.l.b16 %v1184
          %v1201 = vunpack.c.l.b16 %v1185
          %v1202 = vunpack.c.l.b16 %v1186
          %v1203 = vunpack.c.l.b16 %v1187
          %v1204 = vunpack.c.l.b16 %v1188
          %v1205 = vunpack.c.l.b16 %v1189
          %v1206 = vunpack.c.l.b16 %v1190
          %v1207 = vpack.c.b16 %v1200, %v1199
          %v1208 = vpack.c.b16 %v1202, %v1201
          %v1209 = vpack.c.b16 %v1204, %v1203
          %v1210 = vpack.c.b16 %v1206, %v1205
          %1215 = vmatprep.subr.bf16.mxu0 0
          %1216 = vmatpush1.bf16.msra.mxu0 %v1207
          %1217 = vmatprep.subr.bf16.mxu0 0
          %1218 = vmatpush1.bf16.msra.mxu0 %v1208
          %1219 = vmatprep.subr.bf16.mxu0 0
          %1220 = vmatpush1.bf16.msra.mxu0 %v1209
          %1221 = vmatprep.subr.bf16.mxu0 0
          %1222 = vmatpush1.bf16.msra.mxu0 %v1210
          %1223 = vmatprep.subr.bf16.mxu0 0
          %1224 = vmatpush1.bf16.msra.mxu0 0
          %1225 = vmatprep.subr.bf16.mxu0 0
          %1226 = vmatpush1.bf16.msra.mxu0 0
          %1227 = vmatprep.subr.bf16.mxu0 0
          %1228 = vmatpush1.bf16.msra.mxu0 0
          %1229 = vmatprep.subr.bf16.mxu0 0
          %1230 = vmatpush1.bf16.msra.mxu0 0
          %1231 = vmatprep.subr.bf16.mxu0 0
          %1232 = vmatpush1.bf16.msra.mxu0 0
          %1233 = vmatprep.subr.bf16.mxu0 0
          %1234 = vmatpush1.bf16.msra.mxu0 0
          %1235 = vmatprep.subr.bf16.mxu0 0
          %1236 = vmatpush1.bf16.msra.mxu0 0
          %1237 = vmatprep.subr.bf16.mxu0 0
          %1238 = vmatpush1.bf16.msra.mxu0 0
          %1239 = vmatprep.subr.bf16.mxu0 0
          %1240 = vmatpush1.bf16.msra.mxu0 0
          %1241 = vmatprep.subr.bf16.mxu0 0
          %1242 = vmatpush1.bf16.msra.mxu0 0
          %1243 = vmatprep.subr.bf16.mxu0 0
          %1244 = vmatpush1.bf16.msra.mxu0 0
          %1245 = vmatprep.subr.bf16.mxu0 0
          %1246 = vmatpush1.bf16.msra.mxu0 0
          %1247 = vmatprep.mubr.bf16.mxu0 0
          %1248 = vmatmul.mubr.bf16.gmra.mrb[0].mxu0 %v1056
          %v1249 = vpop.f32.mrb[0].mxu0
          %v1250 = vadd.f32 0.0, %v1249
          %v1251 = vpop.f32.mrb[0].mxu0
          %v1252 = vpop.f32.mrb[0].mxu0
          %v1253 = vadd.f32 0.0, %v1252
          %v1254 = vpop.f32.mrb[0].mxu0
          %1255 = vdwg.mxu0
          %v1256 = vpack.c.bf16 %v1253, %v1250
          %vm1257 = vcmask 261120
          %1258 = vst.msk [vmem:[#allocation3] sm:$0xff] %vm1257, %v1182
          %1259 = vst.msk [vmem:[#allocation4] sm:$0xff] %vm1257, %v1256
          %1261 = vrot.lane.b32.xlu0 %v1182, 96
          %v1262 = vpop.permute.xlu0 %1261
          %s1264 = scalar_lea.vmem [#allocation3], 8
          %1265 = vst.msk [vmem:[%s1264] sm:$0xff] %vm1257, %v1262
          %1267 = vrot.lane.b32.xlu0 %v1256, 96
          %v1268 = vpop.permute.xlu0 %1267
          %s1270 = scalar_lea.vmem [#allocation4], 8
          %1271 = vst.msk [vmem:[%s1270] sm:$0xff] %vm1257, %v1268
          %1272 = vrot.lane.b32.xlu0 %v1182, 64
          %v1273 = vpop.permute.xlu0 %1272
          %s1275 = scalar_lea.vmem [#allocation3], 16
          %1276 = vst.msk [vmem:[%s1275] sm:$0xff] %vm1257, %v1273
          %1277 = vrot.lane.b32.xlu0 %v1256, 64
          %v1278 = vpop.permute.xlu0 %1277
          %s1280 = scalar_lea.vmem [#allocation4], 16
          %1281 = vst.msk [vmem:[%s1280] sm:$0xff] %vm1257, %v1278
          %1282 = vrot.lane.b32.xlu0 %v1182, 32
          %v1283 = vpop.permute.xlu0 %1282
          %s1285 = scalar_lea.vmem [#allocation3], 24
          %1286 = vst.msk [vmem:[%s1285] sm:$0xff] %vm1257, %v1283
          %1287 = vrot.lane.b32.xlu0 %v1256, 32
          %v1288 = vpop.permute.xlu0 %1287
          %s1290 = scalar_lea.vmem [#allocation4], 24
          %1291 = vst.msk [vmem:[%s1290] sm:$0xff] %vm1257, %v1288
        $region144: #{tpu_custom_call.1} parent=79 // pred_fallthru
          _
        %s1292 = smul.u32 %s46, 16
        %s1293 = sshra.s32 %s1292, 4
        %s1294 = sand.u32 %s1292, 15
        %s1295 = smul.addr %s1293, 8
        %s1296 = scalar_lea.vmem [#allocation2], %s1295
        %v1297 = vld [vmem:[%s1296] sm:$0xff]
        %s1298 = sshra.s32 %s1292, 3
        %s1299 = sand.u32 %s1292, 7
        %s1300 = smul.addr %s1298, 4
        %s1301 = scalar_lea.vmem [#allocation8], %s1300
        %v1302 = vld [vmem:[%s1301] sm:$0xf]
        %v1303 = vld [vmem:[%s1301 + $0x4] sm:$0xf]
        %s1304 = smul.addr %s1298, 4
        %s1305 = scalar_lea.vmem [#allocation10], %s1304
        %v1306 = vld [vmem:[%s1305] sm:$0xf]
        %v1307 = vld [vmem:[%s1305 + $0x4] sm:$0xf]
        %v1308 = vld [vmem:[#allocation19] sm:$0xf]
        %v1309 = vld [vmem:[#allocation19 + $0x4] sm:$0xf]
        %v1310 = vld [vmem:[#allocation19 + $0x8] sm:$0xf]
        %v1311 = vld [vmem:[#allocation19 + $0xc] sm:$0xf]
        %v1312 = vld [vmem:[#allocation19 + $0x10] sm:$0xf]
        %v1313 = vld [vmem:[#allocation19 + $0x14] sm:$0xf]
        %v1314 = vld [vmem:[#allocation19 + $0x18] sm:$0xf]
        %v1315 = vld [vmem:[#allocation19 + $0x1c] sm:$0xf]
        %v1324 = vunpack.c.l.b16 %v1308
        %v1325 = vunpack.c.l.b16 %v1309
        %v1326 = vunpack.c.l.b16 %v1310
        %v1327 = vunpack.c.l.b16 %v1311
        %v1328 = vunpack.c.l.b16 %v1312
        %v1329 = vunpack.c.l.b16 %v1313
        %v1330 = vunpack.c.l.b16 %v1314
        %v1331 = vunpack.c.l.b16 %v1315
        %v1332 = vpack.c.b16 %v1325, %v1324
        %v1333 = vpack.c.b16 %v1327, %v1326
        %v1334 = vpack.c.b16 %v1329, %v1328
        %v1335 = vpack.c.b16 %v1331, %v1330
        %vm1340 = vcmask 523264
        %v1342 = vsel %vm1340, %v1297, 0
        %1344 = vmatprep.subr.bf16.mxu0 0
        %1345 = vmatpush1.bf16.msra.mxu0 %v1332
        %1346 = vmatprep.subr.bf16.mxu0 0
        %1347 = vmatpush1.bf16.msra.mxu0 %v1333
        %1348 = vmatprep.subr.bf16.mxu0 0
        %1349 = vmatpush1.bf16.msra.mxu0 %v1334
        %1350 = vmatprep.subr.bf16.mxu0 0
        %1351 = vmatpush1.bf16.msra.mxu0 %v1335
        %1352 = vmatprep.subr.bf16.mxu0 0
        %1353 = vmatpush1.bf16.msra.mxu0 0
        %1354 = vmatprep.subr.bf16.mxu0 0
        %1355 = vmatpush1.bf16.msra.mxu0 0
        %1356 = vmatprep.subr.bf16.mxu0 0
        %1357 = vmatpush1.bf16.msra.mxu0 0
        %1358 = vmatprep.subr.bf16.mxu0 0
        %1359 = vmatpush1.bf16.msra.mxu0 0
        %1360 = vmatprep.subr.bf16.mxu0 0
        %1361 = vmatpush1.bf16.msra.mxu0 0
        %1362 = vmatprep.subr.bf16.mxu0 0
        %1363 = vmatpush1.bf16.msra.mxu0 0
        %1364 = vmatprep.subr.bf16.mxu0 0
        %1365 = vmatpush1.bf16.msra.mxu0 0
        %1366 = vmatprep.subr.bf16.mxu0 0
        %1367 = vmatpush1.bf16.msra.mxu0 0
        %1368 = vmatprep.subr.bf16.mxu0 0
        %1369 = vmatpush1.bf16.msra.mxu0 0
        %1370 = vmatprep.subr.bf16.mxu0 0
        %1371 = vmatpush1.bf16.msra.mxu0 0
        %1372 = vmatprep.subr.bf16.mxu0 0
        %1373 = vmatpush1.bf16.msra.mxu0 0
        %1374 = vmatprep.subr.bf16.mxu0 0
        %1375 = vmatpush1.bf16.msra.mxu0 0
        %1376 = vmatprep.mubr.bf16.mxu0 0
        %1377 = vmatmul.mubr.bf16.gmra.mrb[0].mxu0 %v1342
        %v1378 = vpop.f32.mrb[0].mxu0
        %v1379 = vadd.f32 0.0, %v1378
        %v1380 = vpop.f32.mrb[0].mxu0
        %v1381 = vpop.f32.mrb[0].mxu0
        %v1382 = vadd.f32 0.0, %v1381
        %v1383 = vpop.f32.mrb[0].mxu0
        %1384 = vdwg.mxu0
        %v1385 = vunpack.c.l.bf16 %v1302
        %v1386 = vunpack.c.l.bf16 %v1303
        %v1387 = vmul.f32 %v1379, %v1385
        %v1388 = vmul.f32 %v1382, %v1386
        %v1389 = vld [vmem:[#allocation20] sm:$0xf]
        %v1390 = vld [vmem:[#allocation20 + $0x4] sm:$0xf]
        %v1391 = vld [vmem:[#allocation20 + $0x8] sm:$0xf]
        %v1392 = vld [vmem:[#allocation20 + $0xc] sm:$0xf]
        %v1393 = vld [vmem:[#allocation20 + $0x10] sm:$0xf]
        %v1394 = vld [vmem:[#allocation20 + $0x14] sm:$0xf]
        %v1395 = vld [vmem:[#allocation20 + $0x18] sm:$0xf]
        %v1396 = vld [vmem:[#allocation20 + $0x1c] sm:$0xf]
        %v1405 = vunpack.c.l.b16 %v1389
        %v1406 = vunpack.c.l.b16 %v1390
        %v1407 = vunpack.c.l.b16 %v1391
        %v1408 = vunpack.c.l.b16 %v1392
        %v1409 = vunpack.c.l.b16 %v1393
        %v1410 = vunpack.c.l.b16 %v1394
        %v1411 = vunpack.c.l.b16 %v1395
        %v1412 = vunpack.c.l.b16 %v1396
        %v1413 = vpack.c.b16 %v1406, %v1405
        %v1414 = vpack.c.b16 %v1408, %v1407
        %v1415 = vpack.c.b16 %v1410, %v1409
        %v1416 = vpack.c.b16 %v1412, %v1411
        %1421 = vmatprep.subr.bf16.mxu0 0
        %1422 = vmatpush1.bf16.msra.mxu0 %v1413
        %1423 = vmatprep.subr.bf16.mxu0 0
        %1424 = vmatpush1.bf16.msra.mxu0 %v1414
        %1425 = vmatprep.subr.bf16.mxu0 0
        %1426 = vmatpush1.bf16.msra.mxu0 %v1415
        %1427 = vmatprep.subr.bf16.mxu0 0
        %1428 = vmatpush1.bf16.msra.mxu0 %v1416
        %1429 = vmatprep.subr.bf16.mxu0 0
        %1430 = vmatpush1.bf16.msra.mxu0 0
        %1431 = vmatprep.subr.bf16.mxu0 0
        %1432 = vmatpush1.bf16.msra.mxu0 0
        %1433 = vmatprep.subr.bf16.mxu0 0
        %1434 = vmatpush1.bf16.msra.mxu0 0
        %1435 = vmatprep.subr.bf16.mxu0 0
        %1436 = vmatpush1.bf16.msra.mxu0 0
        %1437 = vmatprep.subr.bf16.mxu0 0
        %1438 = vmatpush1.bf16.msra.mxu0 0
        %1439 = vmatprep.subr.bf16.mxu0 0
        %1440 = vmatpush1.bf16.msra.mxu0 0
        %1441 = vmatprep.subr.bf16.mxu0 0
        %1442 = vmatpush1.bf16.msra.mxu0 0
        %1443 = vmatprep.subr.bf16.mxu0 0
        %1444 = vmatpush1.bf16.msra.mxu0 0
        %1445 = vmatprep.subr.bf16.mxu0 0
        %1446 = vmatpush1.bf16.msra.mxu0 0
        %1447 = vmatprep.subr.bf16.mxu0 0
        %1448 = vmatpush1.bf16.msra.mxu0 0
        %1449 = vmatprep.subr.bf16.mxu0 0
        %1450 = vmatpush1.bf16.msra.mxu0 0
        %1451 = vmatprep.subr.bf16.mxu0 0
        %1452 = vmatpush1.bf16.msra.mxu0 0
        %1453 = vmatprep.mubr.bf16.mxu0 0
        %1454 = vmatmul.mubr.bf16.gmra.mrb[0].mxu0 %v1342
        %v1455 = vpop.f32.mrb[0].mxu0
        %v1456 = vadd.f32 0.0, %v1455
        %v1457 = vpop.f32.mrb[0].mxu0
        %v1458 = vpop.f32.mrb[0].mxu0
        %v1459 = vadd.f32 0.0, %v1458
        %v1460 = vpop.f32.mrb[0].mxu0
        %1461 = vdwg.mxu0
        %v1462 = vunpack.c.l.bf16 %v1306
        %v1463 = vunpack.c.l.bf16 %v1307
        %v1464 = vmul.f32 %v1456, %v1462
        %v1465 = vmul.f32 %v1459, %v1463
        %v1466 = vadd.f32 %v1387, %v1464
        %v1467 = vadd.f32 %v1388, %v1465
        %v1468 = vpack.c.bf16 %v1467, %v1466
        %v1469 = vld [vmem:[%s650] sm:$0x1]
        %v1470 = vld [vmem:[#allocation3] sm:$0xff]
        %v1471 = vld [vmem:[#allocation4] sm:$0xff]
        %vm1472 = vcmask 261120
        %v1474 = vsel %vm1472, %v1468, 0
        %v1477 = vsel %vm1472, %v1470, 0
        %1479 = vmatprep.subr.bf16.mxu0 0
        %1480 = vmatpush1.bf16.xpose.msra.mxu0 %v1477
        %1481 = vmatprep.subr.bf16.mxu0 0
        %1482 = vmatpush1.bf16.xpose.msra.mxu0 0
        %1483 = vmatprep.subr.bf16.mxu0 0
        %1484 = vmatpush1.bf16.xpose.msra.mxu0 0
        %1485 = vmatprep.subr.bf16.mxu0 0
        %1486 = vmatpush1.bf16.xpose.msra.mxu0 0
        %1487 = vmatprep.subr.bf16.mxu0 0
        %1488 = vmatpush1.bf16.xpose.msra.mxu0 0
        %1489 = vmatprep.subr.bf16.mxu0 0
        %1490 = vmatpush1.bf16.xpose.msra.mxu0 0
        %1491 = vmatprep.subr.bf16.mxu0 0
        %1492 = vmatpush1.bf16.xpose.msra.mxu0 0
        %1493 = vmatprep.subr.bf16.mxu0 0
        %1494 = vmatpush1.bf16.xpose.msra.mxu0 0
        %1495 = vmatprep.subr.bf16.mxu0 0
        %1496 = vmatpush1.bf16.xpose.msra.mxu0 0
        %1497 = vmatprep.subr.bf16.mxu0 0
        %1498 = vmatpush1.bf16.xpose.msra.mxu0 0
        %1499 = vmatprep.subr.bf16.mxu0 0
        %1500 = vmatpush1.bf16.xpose.msra.mxu0 0
        %1501 = vmatprep.subr.bf16.mxu0 0
        %1502 = vmatpush1.bf16.xpose.msra.mxu0 0
        %1503 = vmatprep.subr.bf16.mxu0 0
        %1504 = vmatpush1.bf16.xpose.msra.mxu0 0
        %1505 = vmatprep.subr.bf16.mxu0 0
        %1506 = vmatpush1.bf16.xpose.msra.mxu0 0
        %1507 = vmatprep.subr.bf16.mxu0 0
        %1508 = vmatpush1.bf16.xpose.msra.mxu0 0
        %1509 = vmatprep.subr.bf16.mxu0 0
        %1510 = vmatpush1.bf16.xpose.msra.mxu0 0
        %1511 = vmatprep.mubr.bf16.mxu0 0
        %1512 = vmatmul.mubr.bf16.gmra.mrb[0].mxu0 %v1474
        %v1513 = vpop.f32.mrb[0].mxu0
        %v1514 = vadd.f32 0.0, %v1513
        %v1515 = vpop.f32.mrb[0].mxu0
        %v1516 = vpop.f32.mrb[0].mxu0
        %v1517 = vadd.f32 0.0, %v1516
        %v1518 = vpop.f32.mrb[0].mxu0
        %1519 = vdwg.mxu0
        %v1520 = vmul.f32 %v1514, 0.17677669
        %v1521 = vmul.f32 %v1517, 0.17677669
        %v1523 = vlaneseq
        %v1524 = vshrl.u32 %v1523, 7
        %v1525 = vsub.s32 0, %v1524
        %v1526 = vrot.slane %v1469, %v1525
        %v1528 = vadd.f32 %v1520, %v1526
        %v1529 = vadd.f32 %v1521, %v1526
        %vm1530 = vcmask 130048
        %v1531 = vsel %vm1530, %v1528, -inf
        %1532 = vmax.xlane.f32.xlu0 %v1531
        %v1533 = vpop.xlane.xlu0 %1532
        %v1534 = vsel %vm1530, %v1529, -inf
        %1535 = vmax.xlane.f32.xlu0 %v1534
        %v1536 = vpop.xlane.xlu0 %1535
        %v1537 = vsub.f32 %v1528, %v1533
        %v1538 = vsub.f32 %v1529, %v1536
        %v1539 = vmul.f32 %v1537, 1.442695
        %v1540 = vpow.pop %v1539
        %v1541 = vmul.f32 %v1538, 1.442695
        %v1542 = vpow.pop %v1541
        %v1543 = vsel %vm1530, %v1540, 0.0
        %1544 = vadd.xlane.f32.xlu0 %v1543
        %v1545 = vpop.xlane.xlu0 %1544
        %v1546 = vsel %vm1530, %v1542, 0.0
        %1547 = vadd.xlane.f32.xlu0 %v1546
        %v1548 = vpop.xlane.xlu0 %1547
        %v1549 = vrcp.pop %v1545
        %v1550 = vrcp.pop %v1548
        %v1551 = vmul.f32 %v1540, %v1549
        %v1552 = vmul.f32 %v1542, %v1550
        %v1553 = vpack.c.bf16 %v1552, %v1551
        %v1555 = vsel %vm1530, %v1553, 0
        %1557 = vmatprep.subr.bf16.mxu0 0
        %1558 = vmatpush1.bf16.msra.mxu0 %v1471
        %1559 = vmatprep.subr.bf16.mxu0 0
        %1560 = vmatpush1.bf16.msra.mxu0 0
        %1561 = vmatprep.subr.bf16.mxu0 0
        %1562 = vmatpush1.bf16.msra.mxu0 0
        %1563 = vmatprep.subr.bf16.mxu0 0
        %1564 = vmatpush1.bf16.msra.mxu0 0
        %1565 = vmatprep.subr.bf16.mxu0 0
        %1566 = vmatpush1.bf16.msra.mxu0 0
        %1567 = vmatprep.subr.bf16.mxu0 0
        %1568 = vmatpush1.bf16.msra.mxu0 0
        %1569 = vmatprep.subr.bf16.mxu0 0
        %1570 = vmatpush1.bf16.msra.mxu0 0
        %1571 = vmatprep.subr.bf16.mxu0 0
        %1572 = vmatpush1.bf16.msra.mxu0 0
        %1573 = vmatprep.subr.bf16.mxu0 0
        %1574 = vmatpush1.bf16.msra.mxu0 0
        %1575 = vmatprep.subr.bf16.mxu0 0
        %1576 = vmatpush1.bf16.msra.mxu0 0
        %1577 = vmatprep.subr.bf16.mxu0 0
        %1578 = vmatpush1.bf16.msra.mxu0 0
        %1579 = vmatprep.subr.bf16.mxu0 0
        %1580 = vmatpush1.bf16.msra.mxu0 0
        %1581 = vmatprep.subr.bf16.mxu0 0
        %1582 = vmatpush1.bf16.msra.mxu0 0
        %1583 = vmatprep.subr.bf16.mxu0 0
        %1584 = vmatpush1.bf16.msra.mxu0 0
        %1585 = vmatprep.subr.bf16.mxu0 0
        %1586 = vmatpush1.bf16.msra.mxu0 0
        %1587 = vmatprep.subr.bf16.mxu0 0
        %1588 = vmatpush1.bf16.msra.mxu0 0
        %1589 = vmatprep.mubr.bf16.mxu0 0
        %1590 = vmatmul.mubr.bf16.gmra.mrb[0].mxu0 %v1555
        %v1591 = vpop.f32.mrb[0].mxu0
        %v1592 = vadd.f32 0.0, %v1591
        %v1593 = vpop.f32.mrb[0].mxu0
        %v1594 = vpop.f32.mrb[0].mxu0
        %v1595 = vadd.f32 0.0, %v1594
        %v1596 = vpop.f32.mrb[0].mxu0
        %1597 = vdwg.mxu0
        %v1598 = vpack.c.bf16 %v1595, %v1592
        %s1599 = scalar_lea.vmem [#allocation3], 8
        %v1600 = vld [vmem:[%s1599] sm:$0xff]
        %s1601 = scalar_lea.vmem [#allocation4], 8
        %v1602 = vld [vmem:[%s1601] sm:$0xff]
        %1604 = vrot.lane.b32.xlu0 %v1468, 96
        %v1605 = vpop.permute.xlu0 %1604
        %v1607 = vsel %vm1472, %v1605, 0
        %v1610 = vsel %vm1472, %v1600, 0
        %1612 = vmatprep.subr.bf16.mxu0 0
        %1613 = vmatpush1.bf16.xpose.msra.mxu0 %v1610
        %1614 = vmatprep.subr.bf16.mxu0 0
        %1615 = vmatpush1.bf16.xpose.msra.mxu0 0
        %1616 = vmatprep.subr.bf16.mxu0 0
        %1617 = vmatpush1.bf16.xpose.msra.mxu0 0
        %1618 = vmatprep.subr.bf16.mxu0 0
        %1619 = vmatpush1.bf16.xpose.msra.mxu0 0
        %1620 = vmatprep.subr.bf16.mxu0 0
        %1621 = vmatpush1.bf16.xpose.msra.mxu0 0
        %1622 = vmatprep.subr.bf16.mxu0 0
        %1623 = vmatpush1.bf16.xpose.msra.mxu0 0
        %1624 = vmatprep.subr.bf16.mxu0 0
        %1625 = vmatpush1.bf16.xpose.msra.mxu0 0
        %1626 = vmatprep.subr.bf16.mxu0 0
        %1627 = vmatpush1.bf16.xpose.msra.mxu0 0
        %1628 = vmatprep.subr.bf16.mxu0 0
        %1629 = vmatpush1.bf16.xpose.msra.mxu0 0
        %1630 = vmatprep.subr.bf16.mxu0 0
        %1631 = vmatpush1.bf16.xpose.msra.mxu0 0
        %1632 = vmatprep.subr.bf16.mxu0 0
        %1633 = vmatpush1.bf16.xpose.msra.mxu0 0
        %1634 = vmatprep.subr.bf16.mxu0 0
        %1635 = vmatpush1.bf16.xpose.msra.mxu0 0
        %1636 = vmatprep.subr.bf16.mxu0 0
        %1637 = vmatpush1.bf16.xpose.msra.mxu0 0
        %1638 = vmatprep.subr.bf16.mxu0 0
        %1639 = vmatpush1.bf16.xpose.msra.mxu0 0
        %1640 = vmatprep.subr.bf16.mxu0 0
        %1641 = vmatpush1.bf16.xpose.msra.mxu0 0
        %1642 = vmatprep.subr.bf16.mxu0 0
        %1643 = vmatpush1.bf16.xpose.msra.mxu0 0
        %1644 = vmatprep.mubr.bf16.mxu0 0
        %1645 = vmatmul.mubr.bf16.gmra.mrb[0].mxu0 %v1607
        %v1646 = vpop.f32.mrb[0].mxu0
        %v1647 = vadd.f32 0.0, %v1646
        %v1648 = vpop.f32.mrb[0].mxu0
        %v1649 = vpop.f32.mrb[0].mxu0
        %v1650 = vadd.f32 0.0, %v1649
        %v1651 = vpop.f32.mrb[0].mxu0
        %1652 = vdwg.mxu0
        %v1653 = vmul.f32 %v1647, 0.17677669
        %v1654 = vmul.f32 %v1650, 0.17677669
        %v1655 = vadd.f32 %v1653, %v1526
        %v1656 = vadd.f32 %v1654, %v1526
        %v1657 = vsel %vm1530, %v1655, -inf
        %1658 = vmax.xlane.f32.xlu0 %v1657
        %v1659 = vpop.xlane.xlu0 %1658
        %v1660 = vsel %vm1530, %v1656, -inf
        %1661 = vmax.xlane.f32.xlu0 %v1660
        %v1662 = vpop.xlane.xlu0 %1661
        %v1663 = vsub.f32 %v1655, %v1659
        %v1664 = vsub.f32 %v1656, %v1662
        %v1665 = vmul.f32 %v1663, 1.442695
        %v1666 = vpow.pop %v1665
        %v1667 = vmul.f32 %v1664, 1.442695
        %v1668 = vpow.pop %v1667
        %v1669 = vsel %vm1530, %v1666, 0.0
        %1670 = vadd.xlane.f32.xlu0 %v1669
        %v1671 = vpop.xlane.xlu0 %1670
        %v1672 = vsel %vm1530, %v1668, 0.0
        %1673 = vadd.xlane.f32.xlu0 %v1672
        %v1674 = vpop.xlane.xlu0 %1673
        %v1675 = vrcp.pop %v1671
        %v1676 = vrcp.pop %v1674
        %v1677 = vmul.f32 %v1666, %v1675
        %v1678 = vmul.f32 %v1668, %v1676
        %v1679 = vpack.c.bf16 %v1678, %v1677
        %v1681 = vsel %vm1530, %v1679, 0
        %1683 = vmatprep.subr.bf16.mxu0 0
        %1684 = vmatpush1.bf16.msra.mxu0 %v1602
        %1685 = vmatprep.subr.bf16.mxu0 0
        %1686 = vmatpush1.bf16.msra.mxu0 0
        %1687 = vmatprep.subr.bf16.mxu0 0
        %1688 = vmatpush1.bf16.msra.mxu0 0
        %1689 = vmatprep.subr.bf16.mxu0 0
        %1690 = vmatpush1.bf16.msra.mxu0 0
        %1691 = vmatprep.subr.bf16.mxu0 0
        %1692 = vmatpush1.bf16.msra.mxu0 0
        %1693 = vmatprep.subr.bf16.mxu0 0
        %1694 = vmatpush1.bf16.msra.mxu0 0
        %1695 = vmatprep.subr.bf16.mxu0 0
        %1696 = vmatpush1.bf16.msra.mxu0 0
        %1697 = vmatprep.subr.bf16.mxu0 0
        %1698 = vmatpush1.bf16.msra.mxu0 0
        %1699 = vmatprep.subr.bf16.mxu0 0
        %1700 = vmatpush1.bf16.msra.mxu0 0
        %1701 = vmatprep.subr.bf16.mxu0 0
        %1702 = vmatpush1.bf16.msra.mxu0 0
        %1703 = vmatprep.subr.bf16.mxu0 0
        %1704 = vmatpush1.bf16.msra.mxu0 0
        %1705 = vmatprep.subr.bf16.mxu0 0
        %1706 = vmatpush1.bf16.msra.mxu0 0
        %1707 = vmatprep.subr.bf16.mxu0 0
        %1708 = vmatpush1.bf16.msra.mxu0 0
        %1709 = vmatprep.subr.bf16.mxu0 0
        %1710 = vmatpush1.bf16.msra.mxu0 0
        %1711 = vmatprep.subr.bf16.mxu0 0
        %1712 = vmatpush1.bf16.msra.mxu0 0
        %1713 = vmatprep.subr.bf16.mxu0 0
        %1714 = vmatpush1.bf16.msra.mxu0 0
        %1715 = vmatprep.mubr.bf16.mxu0 0
        %1716 = vmatmul.mubr.bf16.gmra.mrb[0].mxu0 %v1681
        %v1717 = vpop.f32.mrb[0].mxu0
        %v1718 = vadd.f32 0.0, %v1717
        %v1719 = vpop.f32.mrb[0].mxu0
        %v1720 = vpop.f32.mrb[0].mxu0
        %v1721 = vadd.f32 0.0, %v1720
        %v1722 = vpop.f32.mrb[0].mxu0
        %1723 = vdwg.mxu0
        %v1724 = vpack.c.bf16 %v1721, %v1718
        %s1725 = scalar_lea.vmem [#allocation3], 16
        %v1726 = vld [vmem:[%s1725] sm:$0xff]
        %s1727 = scalar_lea.vmem [#allocation4], 16
        %v1728 = vld [vmem:[%s1727] sm:$0xff]
        %1729 = vrot.lane.b32.xlu0 %v1468, 64
        %v1730 = vpop.permute.xlu0 %1729
        %v1732 = vsel %vm1472, %v1730, 0
        %v1735 = vsel %vm1472, %v1726, 0
        %1737 = vmatprep.subr.bf16.mxu0 0
        %1738 = vmatpush1.bf16.xpose.msra.mxu0 %v1735
        %1739 = vmatprep.subr.bf16.mxu0 0
        %1740 = vmatpush1.bf16.xpose.msra.mxu0 0
        %1741 = vmatprep.subr.bf16.mxu0 0
        %1742 = vmatpush1.bf16.xpose.msra.mxu0 0
        %1743 = vmatprep.subr.bf16.mxu0 0
        %1744 = vmatpush1.bf16.xpose.msra.mxu0 0
        %1745 = vmatprep.subr.bf16.mxu0 0
        %1746 = vmatpush1.bf16.xpose.msra.mxu0 0
        %1747 = vmatprep.subr.bf16.mxu0 0
        %1748 = vmatpush1.bf16.xpose.msra.mxu0 0
        %1749 = vmatprep.subr.bf16.mxu0 0
        %1750 = vmatpush1.bf16.xpose.msra.mxu0 0
        %1751 = vmatprep.subr.bf16.mxu0 0
        %1752 = vmatpush1.bf16.xpose.msra.mxu0 0
        %1753 = vmatprep.subr.bf16.mxu0 0
        %1754 = vmatpush1.bf16.xpose.msra.mxu0 0
        %1755 = vmatprep.subr.bf16.mxu0 0
        %1756 = vmatpush1.bf16.xpose.msra.mxu0 0
        %1757 = vmatprep.subr.bf16.mxu0 0
        %1758 = vmatpush1.bf16.xpose.msra.mxu0 0
        %1759 = vmatprep.subr.bf16.mxu0 0
        %1760 = vmatpush1.bf16.xpose.msra.mxu0 0
        %1761 = vmatprep.subr.bf16.mxu0 0
        %1762 = vmatpush1.bf16.xpose.msra.mxu0 0
        %1763 = vmatprep.subr.bf16.mxu0 0
        %1764 = vmatpush1.bf16.xpose.msra.mxu0 0
        %1765 = vmatprep.subr.bf16.mxu0 0
        %1766 = vmatpush1.bf16.xpose.msra.mxu0 0
        %1767 = vmatprep.subr.bf16.mxu0 0
        %1768 = vmatpush1.bf16.xpose.msra.mxu0 0
        %1769 = vmatprep.mubr.bf16.mxu0 0
        %1770 = vmatmul.mubr.bf16.gmra.mrb[0].mxu0 %v1732
        %v1771 = vpop.f32.mrb[0].mxu0
        %v1772 = vadd.f32 0.0, %v1771
        %v1773 = vpop.f32.mrb[0].mxu0
        %v1774 = vpop.f32.mrb[0].mxu0
        %v1775 = vadd.f32 0.0, %v1774
        %v1776 = vpop.f32.mrb[0].mxu0
        %1777 = vdwg.mxu0
        %v1778 = vmul.f32 %v1772, 0.17677669
        %v1779 = vmul.f32 %v1775, 0.17677669
        %v1780 = vadd.f32 %v1778, %v1526
        %v1781 = vadd.f32 %v1779, %v1526
        %v1782 = vsel %vm1530, %v1780, -inf
        %1783 = vmax.xlane.f32.xlu0 %v1782
        %v1784 = vpop.xlane.xlu0 %1783
        %v1785 = vsel %vm1530, %v1781, -inf
        %1786 = vmax.xlane.f32.xlu0 %v1785
        %v1787 = vpop.xlane.xlu0 %1786
        %v1788 = vsub.f32 %v1780, %v1784
        %v1789 = vsub.f32 %v1781, %v1787
        %v1790 = vmul.f32 %v1788, 1.442695
        %v1791 = vpow.pop %v1790
        %v1792 = vmul.f32 %v1789, 1.442695
        %v1793 = vpow.pop %v1792
        %v1794 = vsel %vm1530, %v1791, 0.0
        %1795 = vadd.xlane.f32.xlu0 %v1794
        %v1796 = vpop.xlane.xlu0 %1795
        %v1797 = vsel %vm1530, %v1793, 0.0
        %1798 = vadd.xlane.f32.xlu0 %v1797
        %v1799 = vpop.xlane.xlu0 %1798
        %v1800 = vrcp.pop %v1796
        %v1801 = vrcp.pop %v1799
        %v1802 = vmul.f32 %v1791, %v1800
        %v1803 = vmul.f32 %v1793, %v1801
        %v1804 = vpack.c.bf16 %v1803, %v1802
        %v1806 = vsel %vm1530, %v1804, 0
        %1808 = vmatprep.subr.bf16.mxu0 0
        %1809 = vmatpush1.bf16.msra.mxu0 %v1728
        %1810 = vmatprep.subr.bf16.mxu0 0
        %1811 = vmatpush1.bf16.msra.mxu0 0
        %1812 = vmatprep.subr.bf16.mxu0 0
        %1813 = vmatpush1.bf16.msra.mxu0 0
        %1814 = vmatprep.subr.bf16.mxu0 0
        %1815 = vmatpush1.bf16.msra.mxu0 0
        %1816 = vmatprep.subr.bf16.mxu0 0
        %1817 = vmatpush1.bf16.msra.mxu0 0
        %1818 = vmatprep.subr.bf16.mxu0 0
        %1819 = vmatpush1.bf16.msra.mxu0 0
        %1820 = vmatprep.subr.bf16.mxu0 0
        %1821 = vmatpush1.bf16.msra.mxu0 0
        %1822 = vmatprep.subr.bf16.mxu0 0
        %1823 = vmatpush1.bf16.msra.mxu0 0
        %1824 = vmatprep.subr.bf16.mxu0 0
        %1825 = vmatpush1.bf16.msra.mxu0 0
        %1826 = vmatprep.subr.bf16.mxu0 0
        %1827 = vmatpush1.bf16.msra.mxu0 0
        %1828 = vmatprep.subr.bf16.mxu0 0
        %1829 = vmatpush1.bf16.msra.mxu0 0
        %1830 = vmatprep.subr.bf16.mxu0 0
        %1831 = vmatpush1.bf16.msra.mxu0 0
        %1832 = vmatprep.subr.bf16.mxu0 0
        %1833 = vmatpush1.bf16.msra.mxu0 0
        %1834 = vmatprep.subr.bf16.mxu0 0
        %1835 = vmatpush1.bf16.msra.mxu0 0
        %1836 = vmatprep.subr.bf16.mxu0 0
        %1837 = vmatpush1.bf16.msra.mxu0 0
        %1838 = vmatprep.subr.bf16.mxu0 0
        %1839 = vmatpush1.bf16.msra.mxu0 0
        %1840 = vmatprep.mubr.bf16.mxu0 0
        %1841 = vmatmul.mubr.bf16.gmra.mrb[0].mxu0 %v1806
        %v1842 = vpop.f32.mrb[0].mxu0
        %v1843 = vadd.f32 0.0, %v1842
        %v1844 = vpop.f32.mrb[0].mxu0
        %v1845 = vpop.f32.mrb[0].mxu0
        %v1846 = vadd.f32 0.0, %v1845
        %v1847 = vpop.f32.mrb[0].mxu0
        %1848 = vdwg.mxu0
        %v1849 = vpack.c.bf16 %v1846, %v1843
        %s1850 = scalar_lea.vmem [#allocation3], 24
        %v1851 = vld [vmem:[%s1850] sm:$0xff]
        %s1852 = scalar_lea.vmem [#allocation4], 24
        %v1853 = vld [vmem:[%s1852] sm:$0xff]
        %1854 = vrot.lane.b32.xlu0 %v1468, 32
        %v1855 = vpop.permute.xlu0 %1854
        %v1857 = vsel %vm1472, %v1855, 0
        %v1860 = vsel %vm1472, %v1851, 0
        %1862 = vmatprep.subr.bf16.mxu0 0
        %1863 = vmatpush1.bf16.xpose.msra.mxu0 %v1860
        %1864 = vmatprep.subr.bf16.mxu0 0
        %1865 = vmatpush1.bf16.xpose.msra.mxu0 0
        %1866 = vmatprep.subr.bf16.mxu0 0
        %1867 = vmatpush1.bf16.xpose.msra.mxu0 0
        %1868 = vmatprep.subr.bf16.mxu0 0
        %1869 = vmatpush1.bf16.xpose.msra.mxu0 0
        %1870 = vmatprep.subr.bf16.mxu0 0
        %1871 = vmatpush1.bf16.xpose.msra.mxu0 0
        %1872 = vmatprep.subr.bf16.mxu0 0
        %1873 = vmatpush1.bf16.xpose.msra.mxu0 0
        %1874 = vmatprep.subr.bf16.mxu0 0
        %1875 = vmatpush1.bf16.xpose.msra.mxu0 0
        %1876 = vmatprep.subr.bf16.mxu0 0
        %1877 = vmatpush1.bf16.xpose.msra.mxu0 0
        %1878 = vmatprep.subr.bf16.mxu0 0
        %1879 = vmatpush1.bf16.xpose.msra.mxu0 0
        %1880 = vmatprep.subr.bf16.mxu0 0
        %1881 = vmatpush1.bf16.xpose.msra.mxu0 0
        %1882 = vmatprep.subr.bf16.mxu0 0
        %1883 = vmatpush1.bf16.xpose.msra.mxu0 0
        %1884 = vmatprep.subr.bf16.mxu0 0
        %1885 = vmatpush1.bf16.xpose.msra.mxu0 0
        %1886 = vmatprep.subr.bf16.mxu0 0
        %1887 = vmatpush1.bf16.xpose.msra.mxu0 0
        %1888 = vmatprep.subr.bf16.mxu0 0
        %1889 = vmatpush1.bf16.xpose.msra.mxu0 0
        %1890 = vmatprep.subr.bf16.mxu0 0
        %1891 = vmatpush1.bf16.xpose.msra.mxu0 0
        %1892 = vmatprep.subr.bf16.mxu0 0
        %1893 = vmatpush1.bf16.xpose.msra.mxu0 0
        %1894 = vmatprep.mubr.bf16.mxu0 0
        %1895 = vmatmul.mubr.bf16.gmra.mrb[0].mxu0 %v1857
        %v1896 = vpop.f32.mrb[0].mxu0
        %v1897 = vadd.f32 0.0, %v1896
        %v1898 = vpop.f32.mrb[0].mxu0
        %v1899 = vpop.f32.mrb[0].mxu0
        %v1900 = vadd.f32 0.0, %v1899
        %v1901 = vpop.f32.mrb[0].mxu0
        %1902 = vdwg.mxu0
        %v1903 = vmul.f32 %v1897, 0.17677669
        %v1904 = vmul.f32 %v1900, 0.17677669
        %v1905 = vadd.f32 %v1903, %v1526
        %v1906 = vadd.f32 %v1904, %v1526
        %v1907 = vsel %vm1530, %v1905, -inf
        %1908 = vmax.xlane.f32.xlu0 %v1907
        %v1909 = vpop.xlane.xlu0 %1908
        %v1910 = vsel %vm1530, %v1906, -inf
        %1911 = vmax.xlane.f32.xlu0 %v1910
        %v1912 = vpop.xlane.xlu0 %1911
        %v1913 = vsub.f32 %v1905, %v1909
        %v1914 = vsub.f32 %v1906, %v1912
        %v1915 = vmul.f32 %v1913, 1.442695
        %v1916 = vpow.pop %v1915
        %v1917 = vmul.f32 %v1914, 1.442695
        %v1918 = vpow.pop %v1917
        %v1919 = vsel %vm1530, %v1916, 0.0
        %1920 = vadd.xlane.f32.xlu0 %v1919
        %v1921 = vpop.xlane.xlu0 %1920
        %v1922 = vsel %vm1530, %v1918, 0.0
        %1923 = vadd.xlane.f32.xlu0 %v1922
        %v1924 = vpop.xlane.xlu0 %1923
        %v1925 = vrcp.pop %v1921
        %v1926 = vrcp.pop %v1924
        %v1927 = vmul.f32 %v1916, %v1925
        %v1928 = vmul.f32 %v1918, %v1926
        %v1929 = vpack.c.bf16 %v1928, %v1927
        %v1931 = vsel %vm1530, %v1929, 0
        %1933 = vmatprep.subr.bf16.mxu0 0
        %1934 = vmatpush1.bf16.msra.mxu0 %v1853
        %1935 = vmatprep.subr.bf16.mxu0 0
        %1936 = vmatpush1.bf16.msra.mxu0 0
        %1937 = vmatprep.subr.bf16.mxu0 0
        %1938 = vmatpush1.bf16.msra.mxu0 0
        %1939 = vmatprep.subr.bf16.mxu0 0
        %1940 = vmatpush1.bf16.msra.mxu0 0
        %1941 = vmatprep.subr.bf16.mxu0 0
        %1942 = vmatpush1.bf16.msra.mxu0 0
        %1943 = vmatprep.subr.bf16.mxu0 0
        %1944 = vmatpush1.bf16.msra.mxu0 0
        %1945 = vmatprep.subr.bf16.mxu0 0
        %1946 = vmatpush1.bf16.msra.mxu0 0
        %1947 = vmatprep.subr.bf16.mxu0 0
        %1948 = vmatpush1.bf16.msra.mxu0 0
        %1949 = vmatprep.subr.bf16.mxu0 0
        %1950 = vmatpush1.bf16.msra.mxu0 0
        %1951 = vmatprep.subr.bf16.mxu0 0
        %1952 = vmatpush1.bf16.msra.mxu0 0
        %1953 = vmatprep.subr.bf16.mxu0 0
        %1954 = vmatpush1.bf16.msra.mxu0 0
        %1955 = vmatprep.subr.bf16.mxu0 0
        %1956 = vmatpush1.bf16.msra.mxu0 0
        %1957 = vmatprep.subr.bf16.mxu0 0
        %1958 = vmatpush1.bf16.msra.mxu0 0
        %1959 = vmatprep.subr.bf16.mxu0 0
        %1960 = vmatpush1.bf16.msra.mxu0 0
        %1961 = vmatprep.subr.bf16.mxu0 0
        %1962 = vmatpush1.bf16.msra.mxu0 0
        %1963 = vmatprep.subr.bf16.mxu0 0
        %1964 = vmatpush1.bf16.msra.mxu0 0
        %1965 = vmatprep.mubr.bf16.mxu0 0
        %1966 = vmatmul.mubr.bf16.gmra.mrb[0].mxu0 %v1931
        %v1967 = vpop.f32.mrb[0].mxu0
        %v1968 = vadd.f32 0.0, %v1967
        %v1969 = vpop.f32.mrb[0].mxu0
        %v1970 = vpop.f32.mrb[0].mxu0
        %v1971 = vadd.f32 0.0, %v1970
        %v1972 = vpop.f32.mrb[0].mxu0
        %1973 = vdwg.mxu0
        %v1974 = vpack.c.bf16 %v1971, %v1968
        %1976 = vrot.lane.b32.xlu0 %v1724, 32
        %v1977 = vpop.permute.xlu0 %1976
        %1979 = vrot.lane.b32.xlu0 %v1849, 64
        %v1980 = vpop.permute.xlu0 %1979
        %1982 = vrot.lane.b32.xlu0 %v1974, 96
        %v1983 = vpop.permute.xlu0 %1982
        %v1986 = vsel %vm1472, %v1598, %v1977
        %v1988 = vsel %vm1340, %v1986, %v1980
        %vm1989 = vcmask 785408
        %v1991 = vsel %vm1989, %v1988, %v1983
        %v1993 = vld [vmem:[#allocation26] sm:$0xf]
        %v1994 = vld [vmem:[#allocation26 + $0x4] sm:$0xf]
        %v1995 = vld [vmem:[#allocation26 + $0x8] sm:$0xf]
        %v1996 = vld [vmem:[#allocation26 + $0xc] sm:$0xf]
        %v1997 = vld [vmem:[#allocation26 + $0x10] sm:$0xf]
        %v1998 = vld [vmem:[#allocation26 + $0x14] sm:$0xf]
        %v1999 = vld [vmem:[#allocation26 + $0x18] sm:$0xf]
        %v2000 = vld [vmem:[#allocation26 + $0x1c] sm:$0xf]
        %v2001 = vld [vmem:[#allocation26 + $0x20] sm:$0xf]
        %v2002 = vld [vmem:[#allocation26 + $0x24] sm:$0xf]
        %v2003 = vld [vmem:[#allocation26 + $0x28] sm:$0xf]
        %v2004 = vld [vmem:[#allocation26 + $0x2c] sm:$0xf]
        %v2005 = vld [vmem:[#allocation26 + $0x30] sm:$0xf]
        %v2006 = vld [vmem:[#allocation26 + $0x34] sm:$0xf]
        %v2007 = vld [vmem:[#allocation26 + $0x38] sm:$0xf]
        %v2008 = vld [vmem:[#allocation26 + $0x3c] sm:$0xf]
        %v2025 = vunpack.c.l.b16 %v1993
        %v2026 = vunpack.c.l.b16 %v1994
        %v2027 = vunpack.c.l.b16 %v1995
        %v2028 = vunpack.c.l.b16 %v1996
        %v2029 = vunpack.c.l.b16 %v1997
        %v2030 = vunpack.c.l.b16 %v1998
        %v2031 = vunpack.c.l.b16 %v1999
        %v2032 = vunpack.c.l.b16 %v2000
        %v2033 = vunpack.c.l.b16 %v2001
        %v2034 = vunpack.c.l.b16 %v2002
        %v2035 = vunpack.c.l.b16 %v2003
        %v2036 = vunpack.c.l.b16 %v2004
        %v2037 = vunpack.c.l.b16 %v2005
        %v2038 = vunpack.c.l.b16 %v2006
        %v2039 = vunpack.c.l.b16 %v2007
        %v2040 = vunpack.c.l.b16 %v2008
        %v2041 = vpack.c.b16 %v2026, %v2025
        %v2042 = vpack.c.b16 %v2028, %v2027
        %v2043 = vpack.c.b16 %v2030, %v2029
        %v2044 = vpack.c.b16 %v2032, %v2031
        %v2045 = vpack.c.b16 %v2034, %v2033
        %v2046 = vpack.c.b16 %v2036, %v2035
        %v2047 = vpack.c.b16 %v2038, %v2037
        %v2048 = vpack.c.b16 %v2040, %v2039
        %2057 = vmatprep.subr.bf16.mxu0 0
        %2058 = vmatpush1.bf16.msra.mxu0 %v2041
        %2059 = vmatprep.subr.bf16.mxu0 0
        %2060 = vmatpush1.bf16.msra.mxu0 %v2042
        %2061 = vmatprep.subr.bf16.mxu0 0
        %2062 = vmatpush1.bf16.msra.mxu0 %v2043
        %2063 = vmatprep.subr.bf16.mxu0 0
        %2064 = vmatpush1.bf16.msra.mxu0 %v2044
        %2065 = vmatprep.subr.bf16.mxu0 0
        %2066 = vmatpush1.bf16.msra.mxu0 %v2045
        %2067 = vmatprep.subr.bf16.mxu0 0
        %2068 = vmatpush1.bf16.msra.mxu0 %v2046
        %2069 = vmatprep.subr.bf16.mxu0 0
        %2070 = vmatpush1.bf16.msra.mxu0 %v2047
        %2071 = vmatprep.subr.bf16.mxu0 0
        %2072 = vmatpush1.bf16.msra.mxu0 %v2048
        %2073 = vmatprep.subr.bf16.mxu0 0
        %2074 = vmatpush1.bf16.msra.mxu0 0
        %2075 = vmatprep.subr.bf16.mxu0 0
        %2076 = vmatpush1.bf16.msra.mxu0 0
        %2077 = vmatprep.subr.bf16.mxu0 0
        %2078 = vmatpush1.bf16.msra.mxu0 0
        %2079 = vmatprep.subr.bf16.mxu0 0
        %2080 = vmatpush1.bf16.msra.mxu0 0
        %2081 = vmatprep.subr.bf16.mxu0 0
        %2082 = vmatpush1.bf16.msra.mxu0 0
        %2083 = vmatprep.subr.bf16.mxu0 0
        %2084 = vmatpush1.bf16.msra.mxu0 0
        %2085 = vmatprep.subr.bf16.mxu0 0
        %2086 = vmatpush1.bf16.msra.mxu0 0
        %2087 = vmatprep.subr.bf16.mxu0 0
        %2088 = vmatpush1.bf16.msra.mxu0 0
        %2089 = vmatprep.mubr.bf16.mxu0 0
        %2090 = vmatmul.mubr.bf16.gmra.mrb[0].mxu0 %v1991
        %v2091 = vpop.f32.mrb[0].mxu0
        %v2092 = vadd.f32 0.0, %v2091
        %v2093 = vpop.f32.mrb[0].mxu0
        %v2094 = vpop.f32.mrb[0].mxu0
        %v2095 = vadd.f32 0.0, %v2094
        %v2096 = vpop.f32.mrb[0].mxu0
        %2097 = vdwg.mxu0
        %v2098 = vpack.c.bf16 %v2095, %v2092
        %v2099 = vld [vmem:[#allocation28] sm:$0xf]
        %v2100 = vld [vmem:[#allocation28 + $0x4] sm:$0xf]
        %v2101 = vld [vmem:[#allocation28 + $0x8] sm:$0xf]
        %v2102 = vld [vmem:[#allocation28 + $0xc] sm:$0xf]
        %v2103 = vld [vmem:[#allocation28 + $0x10] sm:$0xf]
        %v2104 = vld [vmem:[#allocation28 + $0x14] sm:$0xf]
        %v2105 = vld [vmem:[#allocation28 + $0x18] sm:$0xf]
        %v2106 = vld [vmem:[#allocation28 + $0x1c] sm:$0xf]
        %v2115 = vunpack.c.l.b16 %v2099
        %v2116 = vunpack.c.l.b16 %v2100
        %v2117 = vunpack.c.l.b16 %v2101
        %v2118 = vunpack.c.l.b16 %v2102
        %v2119 = vunpack.c.l.b16 %v2103
        %v2120 = vunpack.c.l.b16 %v2104
        %v2121 = vunpack.c.l.b16 %v2105
        %v2122 = vunpack.c.l.b16 %v2106
        %v2123 = vpack.c.b16 %v2116, %v2115
        %v2124 = vpack.c.b16 %v2118, %v2117
        %v2125 = vpack.c.b16 %v2120, %v2119
        %v2126 = vpack.c.b16 %v2122, %v2121
        %v2132 = vsel %vm1340, %v2098, 0
        %2134 = vmatprep.subr.bf16.mxu0 0
        %2135 = vmatpush1.bf16.msra.mxu0 %v2123
        %2136 = vmatprep.subr.bf16.mxu0 0
        %2137 = vmatpush1.bf16.msra.mxu0 %v2124
        %2138 = vmatprep.subr.bf16.mxu0 0
        %2139 = vmatpush1.bf16.msra.mxu0 %v2125
        %2140 = vmatprep.subr.bf16.mxu0 0
        %2141 = vmatpush1.bf16.msra.mxu0 %v2126
        %2142 = vmatprep.subr.bf16.mxu0 0
        %2143 = vmatpush1.bf16.msra.mxu0 0
        %2144 = vmatprep.subr.bf16.mxu0 0
        %2145 = vmatpush1.bf16.msra.mxu0 0
        %2146 = vmatprep.subr.bf16.mxu0 0
        %2147 = vmatpush1.bf16.msra.mxu0 0
        %2148 = vmatprep.subr.bf16.mxu0 0
        %2149 = vmatpush1.bf16.msra.mxu0 0
        %2150 = vmatprep.subr.bf16.mxu0 0
        %2151 = vmatpush1.bf16.msra.mxu0 0
        %2152 = vmatprep.subr.bf16.mxu0 0
        %2153 = vmatpush1.bf16.msra.mxu0 0
        %2154 = vmatprep.subr.bf16.mxu0 0
        %2155 = vmatpush1.bf16.msra.mxu0 0
        %2156 = vmatprep.subr.bf16.mxu0 0
        %2157 = vmatpush1.bf16.msra.mxu0 0
        %2158 = vmatprep.subr.bf16.mxu0 0
        %2159 = vmatpush1.bf16.msra.mxu0 0
        %2160 = vmatprep.subr.bf16.mxu0 0
        %2161 = vmatpush1.bf16.msra.mxu0 0
        %2162 = vmatprep.subr.bf16.mxu0 0
        %2163 = vmatpush1.bf16.msra.mxu0 0
        %2164 = vmatprep.subr.bf16.mxu0 0
        %2165 = vmatpush1.bf16.msra.mxu0 0
        %2166 = vmatprep.mubr.bf16.mxu0 0
        %2167 = vmatmul.mubr.bf16.gmra.mrb[0].mxu0 %v2132
        %v2168 = vpop.f32.mrb[0].mxu0
        %v2169 = vadd.f32 0.0, %v2168
        %v2170 = vpop.f32.mrb[0].mxu0
        %v2171 = vpop.f32.mrb[0].mxu0
        %v2172 = vadd.f32 0.0, %v2171
        %v2173 = vpop.f32.mrb[0].mxu0
        %2174 = vdwg.mxu0
        %2175 = vst [vmem:[%s744] sm:$0xff] %v2169
        %2176 = vst [vmem:[%s744 + $0x8] sm:$0xff] %v2172
        %s2177 = sand.u32 %s388, 1
        %s2178 = scalar_lea.sflag [#allocation7], %s2177
        %s2179 = sand.u32 %s388, 1
        %s2180 = smul.addr %s2179, 16
        %s2181 = scalar_lea.vmem [#allocation29], %s2180
        // Predicated region
        $region145: #{tpu_custom_call.1} parent=79 // pred_check
          %p2182 = pneg %p398
        $region146: #{tpu_custom_call.1} parent=79 // pred_check_branch
          %2184 = sbr.rel (%p2182) target = $region148
        $region147: #{tpu_custom_call.1} parent=79 // pred_region
          %s2185 = smul.u32 2, %s46
          %s2187 = ssub.s32 256, 256
          %2188 = vsyncadd %s2178, %s2187
          %s2189 = smul.addr %s45, 2
          %s2190 = sadd.s32 %s2185, %s2189
          %s2191 = smul.addr %s2190, 128
          %s2192 = scalar_lea.hbm %s15, %s2191
          %s2193 = sshll.u32 %s2181, 4
          %s2194 = int_to_ptr.vmem [resolvable:$true] %s2193
          %2199 = dma.vmem_to_hbm [thread:$0]  %s2194, 256, %s2192, %s2178, 128, 128, 8
        $region148: #{tpu_custom_call.1} parent=79 // pred_fallthru
          _
      $region80: #{tpu_custom_call.1} parent=5 // pred_fallthru
        _
      %p2200 = scmp.le.s32.totalorder 2, %s36
      // Predicated region
      $region149: #{tpu_custom_call.1} parent=5 // pred_check
        %p2201 = pneg %p2200
      $region150: #{tpu_custom_call.1} parent=5 // pred_check_branch
        %2203 = sbr.rel (%p2201) target = $region152
      $region151: #{tpu_custom_call.1} parent=5 // pred_region
        %s2204 = ssub.s32 %s36, 2
        // Predicated region
        $region153: #{tpu_custom_call.1} parent=151 // pred_check
          %p2205 = pneg %p404
        $region154: #{tpu_custom_call.1} parent=151 // pred_check_branch
          %2207 = sbr.rel (%p2205) target = $region156
        $region155: #{tpu_custom_call.1} parent=151 // pred_region
          %s2208 = sand.u32 %s389, 1
          %s2209 = scalar_lea.sflag [#allocation7], %s2208
          %s2210 = sand.u32 %s389, 1
          %s2211 = smul.addr %s2210, 16
          %s2212 = scalar_lea.vmem [#allocation29], %s2211
          %2213 = dma.done %s2209, 256
        $region156: #{tpu_custom_call.1} parent=151 // pred_fallthru
          _
      $region152: #{tpu_custom_call.1} parent=5 // pred_fallthru
        _
    $region6: #{tpu_custom_call.1} parent=1 // loop_footer
      %s40 = sadd.s32 1, %s36
    $region7: #{tpu_custom_call.1} parent=1 // loop_footer_branch
      %35 = sbr.rel target = $region3
    $region8: #{tpu_custom_call.1} parent=1 // loop_exit
      _
    %2214 = vsyncpa [#allocation6], 1
    %s2215 = scalar_lea.sflag [#allocation6], 1
    %2216 = vsyncpa %s2215, 1
    %2217 = vsyncpa [#allocation9], 1
    %2218 = vsyncpa [#allocation12], 1
    %s2219 = scalar_lea.sflag [#allocation12], 1
    %2220 = vsyncpa %s2219, 1
    %2221 = vsyncpa [#allocation15], 1
    %2222 = vsyncpa [#allocation18], 1
    %2223 = vsyncpa [#allocation21], 1
    %2224 = vsyncpa [#allocation24], 1
    %2225 = vsyncpa [#allocation27], 1
    %2226 = vsyncpa [#allocation7], 1
    %s2227 = scalar_lea.sflag [#allocation7], 1
    %2228 = vsyncpa %s2227, 1

</llo_original>
